<compile_context>
chip_gen: v7x
topology: tpu7x:2x2x1
jax: 0.10.0
libtpu: 0.0.40
codegen_flags: <defaults>
</compile_context>

<pallas_src>
import functools

import jax
import jax.numpy as jnp
from jax.experimental import pallas as pl
from jax.experimental.pallas import tpu as pltpu


def _layer_norm(x, gamma, beta, eps):
    mu = jnp.mean(x, axis=-1, keepdims=True)
    var = jnp.mean((x - mu) ** 2, axis=-1, keepdims=True)
    return (x - mu) * jax.lax.rsqrt(var + eps) * gamma + beta


def encoder_layer_kernel(bias_ref, src_ref, wqkv_ref, bqkv_ref, wo_ref, vecd_ref,
                         w1_ref, b1_ref, w2_ref, out_ref, *opt_attn,
                         num_head, d_k, eps, approx_softmax):
    """One grid step = (batch element b, layer l).  Activation carried in out_ref."""
    attn_ref = opt_attn[0] if opt_attn else None
    H, dk = num_head, d_k
    S, D = src_ref.shape
    cdt = wqkv_ref.dtype                      # MXU operand dtype (bf16 by default)

    l = pl.program_id(1)

    # Initialize the activation carry from the encoder input at the first layer.
    @pl.when(l == 0)
    def _init():
        out_ref[...] = src_ref[...]

    x = out_ref[...].astype(jnp.float32)                         # (S, D)
    x_b = jnp.broadcast_to(x.astype(cdt)[None], (H, S, D))       # (H, S, D)

    # Small per-layer vectors, packed as an (8, D) slab:
    # [bo, b2, ln1_g, ln1_b, ln2_g, ln2_b, 0, 0]
    vd = vecd_ref[...].astype(jnp.float32)
    bo, b2 = vd[0:1], vd[1:2]
    ln1_g, ln1_b = vd[2:3], vd[3:4]
    ln2_g, ln2_b = vd[4:5], vd[5:6]

    # ---- fused, head-batched QKV projection (scale folded into Q cols/bias) --
    qkv = jnp.einsum('hsd,hde->hse', x_b, wqkv_ref[...],
                     preferred_element_type=jnp.float32) + bqkv_ref[...]  # (H,S,3dk)
    q = qkv[..., 0 * dk:1 * dk]
    k = qkv[..., 1 * dk:2 * dk]
    v = qkv[..., 2 * dk:3 * dk]

    # ---- scaled-dot-product attention, batched over heads ---------------------
    scores = jnp.einsum('hqd,hkd->hqk', q.astype(cdt), k.astype(cdt),
                        preferred_element_type=jnp.float32)               # (H,S,S)
    scores = scores + bias_ref[...]                    # (1, S) key-mask bias
    scores = scores - jnp.max(scores, axis=-1, keepdims=True)
    e = jnp.exp(scores)
    denom = jnp.sum(e, axis=-1, keepdims=True)
    if approx_softmax:
        attn = e * pl.reciprocal(denom, approx=True)
    else:
        attn = e / denom                               # exact: matches reference
    if attn_ref is not None:
        attn_ref[...] = attn.astype(attn_ref.dtype)    # single store per (b, l)

    ctx = jnp.einsum('hqk,hkd->hqd', attn.astype(cdt), v.astype(cdt),
                     preferred_element_type=jnp.float32)                  # (H,S,dk)

    # ---- output projection: head concat folded into per-head accumulation -----
    o = jnp.dot(ctx[0].astype(cdt), wo_ref[0], preferred_element_type=jnp.float32)
    for h in range(1, H):
        o = o + jnp.dot(ctx[h].astype(cdt), wo_ref[h],
                        preferred_element_type=jnp.float32)
    o = o + bo
    a = _layer_norm(o + x, ln1_g, ln1_b, eps)          # residual + LN1 (post-norm)

    # ---- position-wise feed forward -------------------------------------------
    hdn = jnp.dot(a.astype(cdt), w1_ref[...], preferred_element_type=jnp.float32)
    hdn = jnp.maximum(hdn + b1_ref[...], 0.0)
    f = jnp.dot(hdn.astype(cdt), w2_ref[...], preferred_element_type=jnp.float32) + b2
    y = _layer_norm(f + a, ln2_g, ln2_b, eps)          # residual + LN2 (post-norm)

    out_ref[...] = y.astype(out_ref.dtype)


def pack_encoder_params(layer_params, num_head, param_dtype=jnp.bfloat16):
    """Stack per-layer params (leading layer axis), split QKV/WO per head,
    fold 1/sqrt(d_k) into Q weight+bias, cast matmul weights to `param_dtype`."""
    D = layer_params[0]["wq"].shape[0]
    d_k = D // num_head
    scale = 1.0 / float(d_k) ** 0.5

    def cols(w, h):
        return w[:, h * d_k:(h + 1) * d_k]

    wqkv, bqkv, wo = [], [], []
    for p in layer_params:
        wq_s, bq_s = p["wq"] * scale, p["bq"] * scale
        wqkv.append(jnp.stack([
            jnp.concatenate([cols(wq_s, h), cols(p["wk"], h), cols(p["wv"], h)],
                            axis=1) for h in range(num_head)]))      # (H, D, 3dk)
        bqkv.append(jnp.stack([
            jnp.concatenate([cols(bq_s, h), cols(p["bk"], h), cols(p["bv"], h)],
                            axis=1) for h in range(num_head)]))      # (H, 1, 3dk)
        wo.append(jnp.stack([p["wo"][h * d_k:(h + 1) * d_k, :]
                             for h in range(num_head)]))             # (H, dk, D)

    def vec_slab(p):
        z = jnp.zeros_like(p["bo"])
        return jnp.concatenate([p["bo"], p["b2"], p["ln1_g"], p["ln1_b"],
                                p["ln2_g"], p["ln2_b"], z, z], axis=0)   # (8, D)

    return dict(
        wqkv=jnp.stack(wqkv).astype(param_dtype),                    # (L, H, D, 3dk)
        bqkv=jnp.stack(bqkv).astype(jnp.float32),                    # (L, H, 1, 3dk)
        wo=jnp.stack(wo).astype(param_dtype),                        # (L, H, dk, D)
        vecd=jnp.stack([vec_slab(p) for p in layer_params]).astype(jnp.float32),
        w1=jnp.stack([p["w1"] for p in layer_params]).astype(param_dtype),
        b1=jnp.stack([p["b1"] for p in layer_params]).astype(jnp.float32),
        w2=jnp.stack([p["w2"] for p in layer_params]).astype(param_dtype),
    )


def encoder_forward(src, mask, layer_params, num_head, *, eps=1e-6,
                    return_attn=True, param_dtype=jnp.bfloat16,
                    approx_softmax=False):
    """Mirrors Encoder.forward: out = src; for layer: out, attn = layer(out, mask).

    eps=1e-6 matches the common reference implementation; PyTorch nn.LayerNorm
    default would be 1e-5 — adjust if the reference uses the default.
    """
    B, S, D = src.shape
    L = len(layer_params)
    H = num_head
    d_k = D // H
    d_ff = layer_params[0]["w1"].shape[1]

    packed = pack_encoder_params(layer_params, H, param_dtype)
    # Additive key-mask bias computed once on the host (1 = attend, 0 = masked).
    bias = jnp.where(mask > 0, 0.0, -1e9).astype(jnp.float32)        # (B, 1, S)

    in_specs = [
        pl.BlockSpec((None, 1, S), lambda b, l: (b, 0, 0)),              # bias
        pl.BlockSpec((None, S, D), lambda b, l: (b, 0, 0)),              # src
        pl.BlockSpec((None, H, D, 3 * d_k), lambda b, l: (l, 0, 0, 0)),  # wqkv
        pl.BlockSpec((None, H, 1, 3 * d_k), lambda b, l: (l, 0, 0, 0)),  # bqkv
        pl.BlockSpec((None, H, d_k, D), lambda b, l: (l, 0, 0, 0)),      # wo
        pl.BlockSpec((None, 8, D), lambda b, l: (l, 0, 0)),              # vecd
        pl.BlockSpec((None, D, d_ff), lambda b, l: (l, 0, 0)),           # w1
        pl.BlockSpec((None, 1, d_ff), lambda b, l: (l, 0, 0)),           # b1
        pl.BlockSpec((None, d_ff, D), lambda b, l: (l, 0, 0)),           # w2
    ]
    # Activation carry: same out block for every layer of a given batch element.
    out_shape = [jax.ShapeDtypeStruct((B, S, D), src.dtype)]
    out_specs = [pl.BlockSpec((None, S, D), lambda b, l: (b, 0, 0))]
    if return_attn:
        out_shape.append(jax.ShapeDtypeStruct((L, B, H, S, S), jnp.float32))
        out_specs.append(
            pl.BlockSpec((None, None, H, S, S), lambda b, l: (l, b, 0, 0, 0)))

    kernel = functools.partial(encoder_layer_kernel, num_head=H, d_k=d_k,
                               eps=eps, approx_softmax=approx_softmax)

    grid_spec = pltpu.PrefetchScalarGridSpec(
        num_scalar_prefetch=0,
        grid=(B, L),                       # batch parallel (v7x 2 TCs), layers inner
        in_specs=in_specs,
        out_specs=out_specs,
    )

    # Scoped-VMEM budget: double-buffered per-layer weights + working set,
    # clamped to stay comfortably under v7x's 64 MiB physical VMEM.
    def _nbytes(a):
        return int(a.size) * a.dtype.itemsize
    per_layer = sum(_nbytes(packed[k]) for k in
                    ("wqkv", "bqkv", "wo", "vecd", "w1", "b1", "w2")) // L
    working = (2 * S * D + H * S * S + 3 * H * S * d_k + S * d_ff) * 4 * 4
    vmem_limit = int(min(48 * 1024 * 1024,
                         max(16 * 1024 * 1024, 3 * per_layer + working)))

    results = pl.pallas_call(
        kernel,
        out_shape=out_shape,
        grid_spec=grid_spec,
        compiler_params=pltpu.CompilerParams(
            dimension_semantics=("parallel", "arbitrary"),
            vmem_limit_bytes=vmem_limit),
    )(bias, src, packed["wqkv"], packed["bqkv"], packed["wo"], packed["vecd"],
      packed["w1"], packed["b1"], packed["w2"])

    if return_attn:
        out, attn_stack = results
        return out, [attn_stack[i] for i in range(L)]
    (out,) = results
    return out, []


def init_layer_params(key, d_model, d_ff):
    ks = jax.random.split(key, 6)
    s = 0.02
    return {
        "wq": s * jax.random.normal(ks[0], (d_model, d_model), jnp.float32),
        "bq": jnp.zeros((1, d_model), jnp.float32),
        "wk": s * jax.random.normal(ks[1], (d_model, d_model), jnp.float32),
        "bk": jnp.zeros((1, d_model), jnp.float32),
        "wv": s * jax.random.normal(ks[2], (d_model, d_model), jnp.float32),
        "bv": jnp.zeros((1, d_model), jnp.float32),
        "wo": s * jax.random.normal(ks[3], (d_model, d_model), jnp.float32),
        "bo": jnp.zeros((1, d_model), jnp.float32),
        "ln1_g": jnp.ones((1, d_model), jnp.float32),
        "ln1_b": jnp.zeros((1, d_model), jnp.float32),
        "w1": s * jax.random.normal(ks[4], (d_model, d_ff), jnp.float32),
        "b1": jnp.zeros((1, d_ff), jnp.float32),
        "w2": s * jax.random.normal(ks[5], (d_ff, d_model), jnp.float32),
        "b2": jnp.zeros((1, d_model), jnp.float32),
        "ln2_g": jnp.ones((1, d_model), jnp.float32),
        "ln2_b": jnp.zeros((1, d_model), jnp.float32),
    }


if __name__ == "__main__":
    # Small shapes consistent with the module.
    batch = 2
    seq = 8            # max_length
    d_model = 32
    d_ff = 64
    num_head = 4
    num_layer = 2
    # TODO(synk): dropout_rate is unused (inference-mode identity).
    # TODO(synk): for large seq, replace the full (H,S,S) score tensor with a
    #             flash-style key-block loop (online softmax) to stay in VMEM.

    root = jax.random.PRNGKey(0)
    k_src, k_layers = jax.random.split(root)
    src = jax.random.normal(k_src, (batch, seq, d_model), jnp.float32)
    mask = jnp.ones((batch, 1, seq), jnp.float32)   # 1 = attend, 0 = masked key

    layer_keys = jax.random.split(k_layers, num_layer)
    layer_params = [init_layer_params(k, d_model, d_ff) for k in layer_keys]

    out, attns = encoder_forward(src, mask, layer_params, num_head)
    out = jax.block_until_ready(out)
    attns = [jax.block_until_ready(a) for a in attns]

    assert out.shape == (batch, seq, d_model)
    assert len(attns) == num_layer
    assert all(a.shape == (batch, num_head, seq, seq) for a in attns)
    assert bool(jnp.all(jnp.isfinite(out)))
    assert all(bool(jnp.all(jnp.isfinite(a))) for a in attns)
    # softmax rows must sum to ~1 (exact reciprocal by default)
    assert all(bool(jnp.allclose(jnp.sum(a, axis=-1), 1.0, atol=1e-3)) for a in attns)
    print("KERNEL_OK")
</pallas_src>

<mosaic_0001>
module attributes {stable_mosaic.version = 11 : i64} {
  func.func @encoder_layer_kernel(%arg0: i32, %arg1: i32, %arg2: memref<1x1x8xf32, #tpu.memory_space<vmem>>, %arg3: memref<1x8x32xf32, #tpu.memory_space<vmem>>, %arg4: memref<1x4x32x24xbf16, #tpu.memory_space<vmem>>, %arg5: memref<1x4x1x24xf32, #tpu.memory_space<vmem>>, %arg6: memref<1x4x8x32xbf16, #tpu.memory_space<vmem>>, %arg7: memref<1x8x32xf32, #tpu.memory_space<vmem>>, %arg8: memref<1x32x64xbf16, #tpu.memory_space<vmem>>, %arg9: memref<1x1x64xf32, #tpu.memory_space<vmem>>, %arg10: memref<1x64x32xbf16, #tpu.memory_space<vmem>>, %arg11: memref<1x8x32xf32, #tpu.memory_space<vmem>>, %arg12: memref<1x1x4x8x8xf32, #tpu.memory_space<vmem>>) attributes {dimension_semantics = [#tpu.dimension_semantics<parallel>, #tpu.dimension_semantics<arbitrary>], iteration_bounds = array<i64: 2, 2>, scalar_prefetch = 0 : i64, scratch_operands = 0 : i64, tpu.core_type = #tpu.core_type<tc>, window_params = [{transform_indices = @transform_0, window_bounds = array<i64: 1, 1, 8>}, {transform_indices = @transform_1, window_bounds = array<i64: 1, 8, 32>}, {transform_indices = @transform_2, window_bounds = array<i64: 1, 4, 32, 24>}, {transform_indices = @transform_3, window_bounds = array<i64: 1, 4, 1, 24>}, {transform_indices = @transform_4, window_bounds = array<i64: 1, 4, 8, 32>}, {transform_indices = @transform_5, window_bounds = array<i64: 1, 8, 32>}, {transform_indices = @transform_6, window_bounds = array<i64: 1, 32, 64>}, {transform_indices = @transform_7, window_bounds = array<i64: 1, 1, 64>}, {transform_indices = @transform_8, window_bounds = array<i64: 1, 64, 32>}, {transform_indices = @transform_9, window_bounds = array<i64: 1, 8, 32>}, {transform_indices = @transform_10, window_bounds = array<i64: 1, 1, 4, 8, 8>}]} {
    %c0_i32 = arith.constant 0 : i32
    %0 = arith.cmpi eq, %arg1, %c0_i32 : i32
    %1 = arith.extui %0 : i1 to i32
    %c0_i32_0 = arith.constant 0 : i32
    %2 = arith.cmpi ne, %1, %c0_i32_0 : i32
    scf.if %2 {
      %c0_68 = arith.constant 0 : index
      %c0_69 = arith.constant 0 : index
      %c0_70 = arith.constant 0 : index
      %144 = vector.load %arg3[%c0_68, %c0_69, %c0_70] : memref<1x8x32xf32, #tpu.memory_space<vmem>>, vector<1x8x32xf32>
      %145 = vector.shape_cast %144 : vector<1x8x32xf32> to vector<8x32xf32>
      %c0_71 = arith.constant 0 : index
      %c0_72 = arith.constant 0 : index
      %c0_73 = arith.constant 0 : index
      %146 = vector.load %arg11[%c0_71, %c0_72, %c0_73] : memref<1x8x32xf32, #tpu.memory_space<vmem>>, vector<1x8x32xf32>
      %147 = vector.shape_cast %146 : vector<1x8x32xf32> to vector<8x32xf32>
      %148 = vector.shape_cast %145 : vector<8x32xf32> to vector<1x8x32xf32>
      tpu.vector_store %arg11[%c0_71, %c0_72, %c0_73], %148 {strides = array<i32>} : memref<1x8x32xf32, #tpu.memory_space<vmem>>, vector<1x8x32xf32>,
    } else {
    }
    %c0 = arith.constant 0 : index
    %c0_1 = arith.constant 0 : index
    %c0_2 = arith.constant 0 : index
    %3 = vector.load %arg11[%c0, %c0_1, %c0_2] : memref<1x8x32xf32, #tpu.memory_space<vmem>>, vector<1x8x32xf32>
    %4 = vector.shape_cast %3 : vector<1x8x32xf32> to vector<8x32xf32>
    %5 = arith.truncf %4 : vector<8x32xf32> to vector<8x32xbf16>
    %6 = vector.shape_cast %5 : vector<8x32xbf16> to vector<1x8x32xbf16>
    %7 = vector.shape_cast %6 : vector<1x8x32xbf16> to vector<1x8x32xbf16>
    %8 = vector.broadcast %7 : vector<1x8x32xbf16> to vector<4x8x32xbf16>
    %c0_3 = arith.constant 0 : index
    %c0_4 = arith.constant 0 : index
    %c0_5 = arith.constant 0 : index
    %9 = vector.load %arg7[%c0_3, %c0_4, %c0_5] : memref<1x8x32xf32, #tpu.memory_space<vmem>>, vector<1x8x32xf32>
    %10 = vector.shape_cast %9 : vector<1x8x32xf32> to vector<8x32xf32>
    %11 = vector.extract_strided_slice %10 {offsets = [0, 0], sizes = [1, 32], strides = [1, 1]} : vector<8x32xf32> to vector<1x32xf32>
    %12 = vector.extract_strided_slice %10 {offsets = [1, 0], sizes = [1, 32], strides = [1, 1]} : vector<8x32xf32> to vector<1x32xf32>
    %13 = vector.extract_strided_slice %10 {offsets = [2, 0], sizes = [1, 32], strides = [1, 1]} : vector<8x32xf32> to vector<1x32xf32>
    %14 = vector.extract_strided_slice %10 {offsets = [3, 0], sizes = [1, 32], strides = [1, 1]} : vector<8x32xf32> to vector<1x32xf32>
    %15 = vector.extract_strided_slice %10 {offsets = [4, 0], sizes = [1, 32], strides = [1, 1]} : vector<8x32xf32> to vector<1x32xf32>
    %16 = vector.extract_strided_slice %10 {offsets = [5, 0], sizes = [1, 32], strides = [1, 1]} : vector<8x32xf32> to vector<1x32xf32>
    %c0_6 = arith.constant 0 : index
    %c0_7 = arith.constant 0 : index
    %c0_8 = arith.constant 0 : index
    %c0_9 = arith.constant 0 : index
    %17 = vector.load %arg4[%c0_6, %c0_7, %c0_8, %c0_9] : memref<1x4x32x24xbf16, #tpu.memory_space<vmem>>, vector<1x4x32x24xbf16>
    %18 = vector.shape_cast %17 : vector<1x4x32x24xbf16> to vector<4x32x24xbf16>
    "tpu.trace_start"() <{level = 10 : i32, message = "hsd,hde->hse"}> : () -> ()
    %cst = arith.constant dense<0.000000e+00> : vector<4x8x24xf32>
    %19 = tpu.matmul %8, %18, %cst {dimension_numbers = #tpu.dot_dimension_numbers<[2], [1], [1], [2], [0, 0, 0, 1, 1, 2], [0], [0]>} : vector<4x8x32xbf16>, vector<4x32x24xbf16>, vector<4x8x24xf32> -> vector<4x8x24xf32>
    "tpu.trace_stop"() : () -> ()
    %c0_10 = arith.constant 0 : index
    %c0_11 = arith.constant 0 : index
    %c0_12 = arith.constant 0 : index
    %c0_13 = arith.constant 0 : index
    %20 = vector.load %arg5[%c0_10, %c0_11, %c0_12, %c0_13] : memref<1x4x1x24xf32, #tpu.memory_space<vmem>>, vector<1x4x1x24xf32>
    %21 = vector.shape_cast %20 : vector<1x4x1x24xf32> to vector<4x1x24xf32>
    %22 = vector.broadcast %21 : vector<4x1x24xf32> to vector<4x8x24xf32>
    %23 = arith.addf %19, %22 : vector<4x8x24xf32>
    %24 = vector.extract_strided_slice %23 {offsets = [0, 0, 0], sizes = [4, 8, 8], strides = [1, 1, 1]} : vector<4x8x24xf32> to vector<4x8x8xf32>
    %25 = vector.extract_strided_slice %23 {offsets = [0, 0, 8], sizes = [4, 8, 8], strides = [1, 1, 1]} : vector<4x8x24xf32> to vector<4x8x8xf32>
    %26 = vector.extract_strided_slice %23 {offsets = [0, 0, 16], sizes = [4, 8, 8], strides = [1, 1, 1]} : vector<4x8x24xf32> to vector<4x8x8xf32>
    %27 = arith.truncf %24 : vector<4x8x8xf32> to vector<4x8x8xbf16>
    %28 = arith.truncf %25 : vector<4x8x8xf32> to vector<4x8x8xbf16>
    "tpu.trace_start"() <{level = 10 : i32, message = "hqd,hkd->hqk"}> : () -> ()
    %cst_14 = arith.constant dense<0.000000e+00> : vector<4x8x8xf32>
    %29 = tpu.matmul %27, %28, %cst_14 {dimension_numbers = #tpu.dot_dimension_numbers<[2], [2], [1], [1], [0, 0, 0, 1, 1, 1], [0], [0]>} : vector<4x8x8xbf16>, vector<4x8x8xbf16>, vector<4x8x8xf32> -> vector<4x8x8xf32>
    "tpu.trace_stop"() : () -> ()
    %c0_15 = arith.constant 0 : index
    %c0_16 = arith.constant 0 : index
    %c0_17 = arith.constant 0 : index
    %30 = vector.load %arg2[%c0_15, %c0_16, %c0_17] : memref<1x1x8xf32, #tpu.memory_space<vmem>>, vector<1x1x8xf32>
    %31 = vector.shape_cast %30 : vector<1x1x8xf32> to vector<1x8xf32>
    %32 = vector.shape_cast %31 : vector<1x8xf32> to vector<1x1x8xf32>
    %33 = vector.broadcast %32 : vector<1x1x8xf32> to vector<4x8x8xf32>
    %34 = arith.addf %29, %33 : vector<4x8x8xf32>
    %cst_18 = arith.constant dense<0xFF800000> : vector<4x8xf32>
    %35 = vector.multi_reduction <maximumf>, %34, %cst_18 [2] : vector<4x8x8xf32> to vector<4x8xf32>
    %36 = vector.shape_cast %35 : vector<4x8xf32> to vector<4x8x1xf32>
    %37 = vector.broadcast %36 : vector<4x8x1xf32> to vector<4x8x8xf32>
    %38 = arith.subf %34, %37 : vector<4x8x8xf32>
    %39 = math.exp %38 : vector<4x8x8xf32>
    %cst_19 = arith.constant dense<0.000000e+00> : vector<4x8xf32>
    %40 = vector.multi_reduction <add>, %39, %cst_19 [2] : vector<4x8x8xf32> to vector<4x8xf32>
    %41 = vector.shape_cast %40 : vector<4x8xf32> to vector<4x8x1xf32>
    %42 = vector.broadcast %41 : vector<4x8x1xf32> to vector<4x8x8xf32>
    %43 = arith.divf %39, %42 : vector<4x8x8xf32>
    %c0_20 = arith.constant 0 : index
    %c0_21 = arith.constant 0 : index
    %c0_22 = arith.constant 0 : index
    %c0_23 = arith.constant 0 : index
    %c0_24 = arith.constant 0 : index
    %44 = vector.load %arg12[%c0_20, %c0_21, %c0_22, %c0_23, %c0_24] : memref<1x1x4x8x8xf32, #tpu.memory_space<vmem>>, vector<1x1x4x8x8xf32>
    %45 = vector.shape_cast %44 : vector<1x1x4x8x8xf32> to vector<4x8x8xf32>
    %46 = vector.shape_cast %43 : vector<4x8x8xf32> to vector<1x1x4x8x8xf32>
    tpu.vector_store %arg12[%c0_20, %c0_21, %c0_22, %c0_23, %c0_24], %46 {strides = array<i32>} : memref<1x1x4x8x8xf32, #tpu.memory_space<vmem>>, vector<1x1x4x8x8xf32>,
    %47 = arith.truncf %43 : vector<4x8x8xf32> to vector<4x8x8xbf16>
    %48 = arith.truncf %26 : vector<4x8x8xf32> to vector<4x8x8xbf16>
    "tpu.trace_start"() <{level = 10 : i32, message = "hqk,hkd->hqd"}> : () -> ()
    %cst_25 = arith.constant dense<0.000000e+00> : vector<4x8x8xf32>
    %49 = tpu.matmul %47, %48, %cst_25 {dimension_numbers = #tpu.dot_dimension_numbers<[2], [1], [1], [2], [0, 0, 0, 1, 1, 2], [0], [0]>} : vector<4x8x8xbf16>, vector<4x8x8xbf16>, vector<4x8x8xf32> -> vector<4x8x8xf32>
    "tpu.trace_stop"() : () -> ()
    %50 = vector.extract_strided_slice %49 {offsets = [0, 0, 0], sizes = [1, 8, 8], strides = [1, 1, 1]} : vector<4x8x8xf32> to vector<1x8x8xf32>
    %51 = vector.shape_cast %50 : vector<1x8x8xf32> to vector<8x8xf32>
    %52 = arith.truncf %51 : vector<8x8xf32> to vector<8x8xbf16>
    %c0_26 = arith.constant 0 : index
    %c0_27 = arith.constant 0 : index
    %c0_28 = arith.constant 0 : index
    %c0_29 = arith.constant 0 : index
    %53 = vector.load %arg6[%c0_26, %c0_27, %c0_28, %c0_29] : memref<1x4x8x32xbf16, #tpu.memory_space<vmem>>, vector<1x1x8x32xbf16>
    %54 = vector.shape_cast %53 : vector<1x1x8x32xbf16> to vector<8x32xbf16>
    %cst_30 = arith.constant dense<0.000000e+00> : vector<8x32xf32>
    %55 = tpu.matmul %52, %54, %cst_30 {dimension_numbers = #tpu.dot_dimension_numbers<[1], [0], [0], [1], [0, 0, 1, 1], [], []>} : vector<8x8xbf16>, vector<8x32xbf16>, vector<8x32xf32> -> vector<8x32xf32>
    %56 = vector.extract_strided_slice %49 {offsets = [1, 0, 0], sizes = [1, 8, 8], strides = [1, 1, 1]} : vector<4x8x8xf32> to vector<1x8x8xf32>
    %57 = vector.shape_cast %56 : vector<1x8x8xf32> to vector<8x8xf32>
    %58 = arith.truncf %57 : vector<8x8xf32> to vector<8x8xbf16>
    %c0_31 = arith.constant 0 : index
    %c1 = arith.constant 1 : index
    %c0_32 = arith.constant 0 : index
    %c0_33 = arith.constant 0 : index
    %59 = vector.load %arg6[%c0_31, %c1, %c0_32, %c0_33] : memref<1x4x8x32xbf16, #tpu.memory_space<vmem>>, vector<1x1x8x32xbf16>
    %60 = vector.shape_cast %59 : vector<1x1x8x32xbf16> to vector<8x32xbf16>
    %cst_34 = arith.constant dense<0.000000e+00> : vector<8x32xf32>
    %61 = tpu.matmul %58, %60, %cst_34 {dimension_numbers = #tpu.dot_dimension_numbers<[1], [0], [0], [1], [0, 0, 1, 1], [], []>} : vector<8x8xbf16>, vector<8x32xbf16>, vector<8x32xf32> -> vector<8x32xf32>
    %62 = arith.addf %55, %61 : vector<8x32xf32>
    %63 = vector.extract_strided_slice %49 {offsets = [2, 0, 0], sizes = [1, 8, 8], strides = [1, 1, 1]} : vector<4x8x8xf32> to vector<1x8x8xf32>
    %64 = vector.shape_cast %63 : vector<1x8x8xf32> to vector<8x8xf32>
    %65 = arith.truncf %64 : vector<8x8xf32> to vector<8x8xbf16>
    %c0_35 = arith.constant 0 : index
    %c2 = arith.constant 2 : index
    %c0_36 = arith.constant 0 : index
    %c0_37 = arith.constant 0 : index
    %66 = vector.load %arg6[%c0_35, %c2, %c0_36, %c0_37] : memref<1x4x8x32xbf16, #tpu.memory_space<vmem>>, vector<1x1x8x32xbf16>
    %67 = vector.shape_cast %66 : vector<1x1x8x32xbf16> to vector<8x32xbf16>
    %cst_38 = arith.constant dense<0.000000e+00> : vector<8x32xf32>
    %68 = tpu.matmul %65, %67, %cst_38 {dimension_numbers = #tpu.dot_dimension_numbers<[1], [0], [0], [1], [0, 0, 1, 1], [], []>} : vector<8x8xbf16>, vector<8x32xbf16>, vector<8x32xf32> -> vector<8x32xf32>
    %69 = arith.addf %62, %68 : vector<8x32xf32>
    %70 = vector.extract_strided_slice %49 {offsets = [3, 0, 0], sizes = [1, 8, 8], strides = [1, 1, 1]} : vector<4x8x8xf32> to vector<1x8x8xf32>
    %71 = vector.shape_cast %70 : vector<1x8x8xf32> to vector<8x8xf32>
    %72 = arith.truncf %71 : vector<8x8xf32> to vector<8x8xbf16>
    %c0_39 = arith.constant 0 : index
    %c3 = arith.constant 3 : index
    %c0_40 = arith.constant 0 : index
    %c0_41 = arith.constant 0 : index
    %73 = vector.load %arg6[%c0_39, %c3, %c0_40, %c0_41] : memref<1x4x8x32xbf16, #tpu.memory_space<vmem>>, vector<1x1x8x32xbf16>
    %74 = vector.shape_cast %73 : vector<1x1x8x32xbf16> to vector<8x32xbf16>
    %cst_42 = arith.constant dense<0.000000e+00> : vector<8x32xf32>
    %75 = tpu.matmul %72, %74, %cst_42 {dimension_numbers = #tpu.dot_dimension_numbers<[1], [0], [0], [1], [0, 0, 1, 1], [], []>} : vector<8x8xbf16>, vector<8x32xbf16>, vector<8x32xf32> -> vector<8x32xf32>
    %76 = arith.addf %69, %75 : vector<8x32xf32>
    %77 = vector.broadcast %11 : vector<1x32xf32> to vector<8x32xf32>
    %78 = arith.addf %76, %77 : vector<8x32xf32>
    %79 = arith.addf %78, %4 : vector<8x32xf32>
    %cst_43 = arith.constant dense<0.000000e+00> : vector<8xf32>
    %80 = vector.multi_reduction <add>, %79, %cst_43 [1] : vector<8x32xf32> to vector<8xf32>
    %81 = vector.shape_cast %80 : vector<8xf32> to vector<8x1xf32>
    %cst_44 = arith.constant 3.200000e+01 : f32
    %82 = vector.broadcast %cst_44 : f32 to vector<8x1xf32>
    %83 = arith.divf %81, %82 : vector<8x1xf32>
    %84 = vector.broadcast %83 : vector<8x1xf32> to vector<8x32xf32>
    %85 = arith.subf %79, %84 : vector<8x32xf32>
    %86 = arith.mulf %85, %85 : vector<8x32xf32>
    %cst_45 = arith.constant dense<0.000000e+00> : vector<8xf32>
    %87 = vector.multi_reduction <add>, %86, %cst_45 [1] : vector<8x32xf32> to vector<8xf32>
    %88 = vector.shape_cast %87 : vector<8xf32> to vector<8x1xf32>
    %cst_46 = arith.constant 3.200000e+01 : f32
    %89 = vector.broadcast %cst_46 : f32 to vector<8x1xf32>
    %90 = arith.divf %88, %89 : vector<8x1xf32>
    %91 = vector.broadcast %83 : vector<8x1xf32> to vector<8x32xf32>
    %92 = arith.subf %79, %91 : vector<8x32xf32>
    %cst_47 = arith.constant 9.99999997E-7 : f32
    %93 = vector.broadcast %cst_47 : f32 to vector<8x1xf32>
    %94 = arith.addf %90, %93 : vector<8x1xf32>
    %95 = math.rsqrt %94 : vector<8x1xf32>
    %96 = vector.broadcast %95 : vector<8x1xf32> to vector<8x32xf32>
    %97 = arith.mulf %92, %96 : vector<8x32xf32>
    %98 = vector.broadcast %13 : vector<1x32xf32> to vector<8x32xf32>
    %99 = arith.mulf %97, %98 : vector<8x32xf32>
    %100 = vector.broadcast %14 : vector<1x32xf32> to vector<8x32xf32>
    %101 = arith.addf %99, %100 : vector<8x32xf32>
    %102 = arith.truncf %101 : vector<8x32xf32> to vector<8x32xbf16>
    %c0_48 = arith.constant 0 : index
    %c0_49 = arith.constant 0 : index
    %c0_50 = arith.constant 0 : index
    %103 = vector.load %arg8[%c0_48, %c0_49, %c0_50] : memref<1x32x64xbf16, #tpu.memory_space<vmem>>, vector<1x32x64xbf16>
    %104 = vector.shape_cast %103 : vector<1x32x64xbf16> to vector<32x64xbf16>
    %cst_51 = arith.constant dense<0.000000e+00> : vector<8x64xf32>
    %105 = tpu.matmul %102, %104, %cst_51 {dimension_numbers = #tpu.dot_dimension_numbers<[1], [0], [0], [1], [0, 0, 1, 1], [], []>} : vector<8x32xbf16>, vector<32x64xbf16>, vector<8x64xf32> -> vector<8x64xf32>
    %c0_52 = arith.constant 0 : index
    %c0_53 = arith.constant 0 : index
    %c0_54 = arith.constant 0 : index
    %106 = vector.load %arg9[%c0_52, %c0_53, %c0_54] : memref<1x1x64xf32, #tpu.memory_space<vmem>>, vector<1x1x64xf32>
    %107 = vector.shape_cast %106 : vector<1x1x64xf32> to vector<1x64xf32>
    %108 = vector.broadcast %107 : vector<1x64xf32> to vector<8x64xf32>
    %109 = arith.addf %105, %108 : vector<8x64xf32>
    %cst_55 = arith.constant 0.000000e+00 : f32
    %110 = vector.broadcast %cst_55 : f32 to vector<8x64xf32>
    %111 = arith.maximumf %109, %110 : vector<8x64xf32>
    %112 = arith.truncf %111 : vector<8x64xf32> to vector<8x64xbf16>
    %c0_56 = arith.constant 0 : index
    %c0_57 = arith.constant 0 : index
    %c0_58 = arith.constant 0 : index
    %113 = vector.load %arg10[%c0_56, %c0_57, %c0_58] : memref<1x64x32xbf16, #tpu.memory_space<vmem>>, vector<1x64x32xbf16>
    %114 = vector.shape_cast %113 : vector<1x64x32xbf16> to vector<64x32xbf16>
    %cst_59 = arith.constant dense<0.000000e+00> : vector<8x32xf32>
    %115 = tpu.matmul %112, %114, %cst_59 {dimension_numbers = #tpu.dot_dimension_numbers<[1], [0], [0], [1], [0, 0, 1, 1], [], []>} : vector<8x64xbf16>, vector<64x32xbf16>, vector<8x32xf32> -> vector<8x32xf32>
    %116 = vector.broadcast %12 : vector<1x32xf32> to vector<8x32xf32>
    %117 = arith.addf %115, %116 : vector<8x32xf32>
    %118 = arith.addf %117, %101 : vector<8x32xf32>
    %cst_60 = arith.constant dense<0.000000e+00> : vector<8xf32>
    %119 = vector.multi_reduction <add>, %118, %cst_60 [1] : vector<8x32xf32> to vector<8xf32>
    %120 = vector.shape_cast %119 : vector<8xf32> to vector<8x1xf32>
    %cst_61 = arith.constant 3.200000e+01 : f32
    %121 = vector.broadcast %cst_61 : f32 to vector<8x1xf32>
    %122 = arith.divf %120, %121 : vector<8x1xf32>
    %123 = vector.broadcast %122 : vector<8x1xf32> to vector<8x32xf32>
    %124 = arith.subf %118, %123 : vector<8x32xf32>
    %125 = arith.mulf %124, %124 : vector<8x32xf32>
    %cst_62 = arith.constant dense<0.000000e+00> : vector<8xf32>
    %126 = vector.multi_reduction <add>, %125, %cst_62 [1] : vector<8x32xf32> to vector<8xf32>
    %127 = vector.shape_cast %126 : vector<8xf32> to vector<8x1xf32>
    %cst_63 = arith.constant 3.200000e+01 : f32
    %128 = vector.broadcast %cst_63 : f32 to vector<8x1xf32>
    %129 = arith.divf %127, %128 : vector<8x1xf32>
    %130 = vector.broadcast %122 : vector<8x1xf32> to vector<8x32xf32>
    %131 = arith.subf %118, %130 : vector<8x32xf32>
    %cst_64 = arith.constant 9.99999997E-7 : f32
    %132 = vector.broadcast %cst_64 : f32 to vector<8x1xf32>
    %133 = arith.addf %129, %132 : vector<8x1xf32>
    %134 = math.rsqrt %133 : vector<8x1xf32>
    %135 = vector.broadcast %134 : vector<8x1xf32> to vector<8x32xf32>
    %136 = arith.mulf %131, %135 : vector<8x32xf32>
    %137 = vector.broadcast %15 : vector<1x32xf32> to vector<8x32xf32>
    %138 = arith.mulf %136, %137 : vector<8x32xf32>
    %139 = vector.broadcast %16 : vector<1x32xf32> to vector<8x32xf32>
    %140 = arith.addf %138, %139 : vector<8x32xf32>
    %c0_65 = arith.constant 0 : index
    %c0_66 = arith.constant 0 : index
    %c0_67 = arith.constant 0 : index
    %141 = vector.load %arg11[%c0_65, %c0_66, %c0_67] : memref<1x8x32xf32, #tpu.memory_space<vmem>>, vector<1x8x32xf32>
    %142 = vector.shape_cast %141 : vector<1x8x32xf32> to vector<8x32xf32>
    %143 = vector.shape_cast %140 : vector<8x32xf32> to vector<1x8x32xf32>
    tpu.vector_store %arg11[%c0_65, %c0_66, %c0_67], %143 {strides = array<i32>} : memref<1x8x32xf32, #tpu.memory_space<vmem>>, vector<1x8x32xf32>,
    return
  }
  func.func @transform_0(%arg0: i32, %arg1: i32) -> (i32, i32, i32) {
    %c0_i32 = arith.constant 0 : i32
    %c0_i32_0 = arith.constant 0 : i32
    %c0_i32_1 = arith.constant 0 : i32
    return %arg0, %c0_i32, %c0_i32_0 : i32, i32, i32
  }
  func.func @transform_1(%arg0: i32, %arg1: i32) -> (i32, i32, i32) {
    %c0_i32 = arith.constant 0 : i32
    %c0_i32_0 = arith.constant 0 : i32
    %c0_i32_1 = arith.constant 0 : i32
    return %arg0, %c0_i32, %c0_i32_0 : i32, i32, i32
  }
  func.func @transform_2(%arg0: i32, %arg1: i32) -> (i32, i32, i32, i32) {
    %c0_i32 = arith.constant 0 : i32
    %c0_i32_0 = arith.constant 0 : i32
    %c0_i32_1 = arith.constant 0 : i32
    %c0_i32_2 = arith.constant 0 : i32
    return %arg1, %c0_i32, %c0_i32_0, %c0_i32_1 : i32, i32, i32, i32
  }
  func.func @transform_3(%arg0: i32, %arg1: i32) -> (i32, i32, i32, i32) {
    %c0_i32 = arith.constant 0 : i32
    %c0_i32_0 = arith.constant 0 : i32
    %c0_i32_1 = arith.constant 0 : i32
    %c0_i32_2 = arith.constant 0 : i32
    return %arg1, %c0_i32, %c0_i32_0, %c0_i32_1 : i32, i32, i32, i32
  }
  func.func @transform_4(%arg0: i32, %arg1: i32) -> (i32, i32, i32, i32) {
    %c0_i32 = arith.constant 0 : i32
    %c0_i32_0 = arith.constant 0 : i32
    %c0_i32_1 = arith.constant 0 : i32
    %c0_i32_2 = arith.constant 0 : i32
    return %arg1, %c0_i32, %c0_i32_0, %c0_i32_1 : i32, i32, i32, i32
  }
  func.func @transform_5(%arg0: i32, %arg1: i32) -> (i32, i32, i32) {
    %c0_i32 = arith.constant 0 : i32
    %c0_i32_0 = arith.constant 0 : i32
    %c0_i32_1 = arith.constant 0 : i32
    return %arg1, %c0_i32, %c0_i32_0 : i32, i32, i32
  }
  func.func @transform_6(%arg0: i32, %arg1: i32) -> (i32, i32, i32) {
    %c0_i32 = arith.constant 0 : i32
    %c0_i32_0 = arith.constant 0 : i32
    %c0_i32_1 = arith.constant 0 : i32
    return %arg1, %c0_i32, %c0_i32_0 : i32, i32, i32
  }
  func.func @transform_7(%arg0: i32, %arg1: i32) -> (i32, i32, i32) {
    %c0_i32 = arith.constant 0 : i32
    %c0_i32_0 = arith.constant 0 : i32
    %c0_i32_1 = arith.constant 0 : i32
    return %arg1, %c0_i32, %c0_i32_0 : i32, i32, i32
  }
  func.func @transform_8(%arg0: i32, %arg1: i32) -> (i32, i32, i32) {
    %c0_i32 = arith.constant 0 : i32
    %c0_i32_0 = arith.constant 0 : i32
    %c0_i32_1 = arith.constant 0 : i32
    return %arg1, %c0_i32, %c0_i32_0 : i32, i32, i32
  }
  func.func @transform_9(%arg0: i32, %arg1: i32) -> (i32, i32, i32) {
    %c0_i32 = arith.constant 0 : i32
    %c0_i32_0 = arith.constant 0 : i32
    %c0_i32_1 = arith.constant 0 : i32
    return %arg0, %c0_i32, %c0_i32_0 : i32, i32, i32
  }
  func.func @transform_10(%arg0: i32, %arg1: i32) -> (i32, i32, i32, i32, i32) {
    %c0_i32 = arith.constant 0 : i32
    %c0_i32_0 = arith.constant 0 : i32
    %c0_i32_1 = arith.constant 0 : i32
    %c0_i32_2 = arith.constant 0 : i32
    return %arg1, %arg0, %c0_i32, %c0_i32_0, %c0_i32_1 : i32, i32, i32, i32, i32
  }
}

</mosaic_0001>

<llo_original>
// kernel: tpu_custom_call.1
$region0: #{tpu_custom_call.1}
  #allocation0 [shape = 'u32[]', space=smem, size = 0x4, offset = 0x4, fixed_abs, tag = 'smem constant byte address 0x4 - core index']
  #allocation1 [shape = 'u32[144,128]{1,0:T(1,128)}', space=vmem, size = 0x12000, scoped, tag = 'internal scratch']
  %s0 = inlined_call_operand.vmem [shape: f32[2,1,8], index: 0, kind: input, shape index: {}]
  %s1 = inlined_call_operand.vmem [shape: f32[2,8,32], index: 1, kind: input, shape index: {}]
  %s2 = inlined_call_operand.vmem [shape: bf16[2,4,32,24], index: 2, kind: input, shape index: {}]
  %s3 = inlined_call_operand.vmem [shape: f32[2,4,1,24], index: 3, kind: input, shape index: {}]
  %s4 = inlined_call_operand.vmem [shape: bf16[2,4,8,32], index: 4, kind: input, shape index: {}]
  %s5 = inlined_call_operand.vmem [shape: f32[2,8,32], index: 5, kind: input, shape index: {}]
  %s6 = inlined_call_operand.vmem [shape: bf16[2,32,64], index: 6, kind: input, shape index: {}]
  %s7 = inlined_call_operand.vmem [shape: f32[2,1,64], index: 7, kind: input, shape index: {}]
  %s8 = inlined_call_operand.vmem [shape: bf16[2,64,32], index: 8, kind: input, shape index: {}]
  %s9 = inlined_call_operand.hbm [shape: f32[2,8,32], index: 9, kind: output, shape index: {0}]
  %s10 = inlined_call_operand.hbm [shape: f32[2,2,4,8,8], index: 10, kind: output, shape index: {1}]
  %11 = xla_tuple %s9, %s10
  %s12 = sld [smem:[#allocation0]]
  $region81: #{tpu_custom_call.1} parent=0
    _
  %s14 = ssub.s32 1, %s12
  %s15 = scalar_select 0, %s14, %s12
  $region1: #{tpu_custom_call.1} parent=0
    #allocation2 [shape = 'u8[8192]{0}', space=vmem, size = 0x2000, scoped, tag = 'output window, operand 0']
    #allocation3 [shape = 's32[2]{0}', space=sflag, size = 0x8, scoped, tag = 'scoped memory for tpu_custom_call.1']
    #allocation4 [shape = 'u8[32768]{0}', space=vmem, size = 0x8000, scoped, tag = 'output window, operand 1']
    #allocation5 [shape = 's32[2]{0}', space=sflag, size = 0x8, scoped, tag = 'scoped memory for tpu_custom_call.1']
    %16 = vsyncpa [#allocation3], 0
    %s17 = scalar_lea.sflag [#allocation3], 1
    %18 = vsyncpa %s17, 0
    %19 = vsyncpa [#allocation5], 0
    %s20 = scalar_lea.sflag [#allocation5], 1
    %21 = vsyncpa %s20, 0
    loop: start=0, step=1, limit=6
    $region2: #{tpu_custom_call.1} parent=1 // loop_pre_header
      _
    $region3: #{tpu_custom_call.1} parent=1 // loop_header
      %s23 = sphi 0, %s27
      %p24 = scmp.ge.s32.totalorder %s23, 6
      %s30 = sphi 0, %s42
      %s31 = sphi 0, %s38
      %s32 = sphi 0, %s30
      %s33 = sphi 0, %s31
      %s34 = sphi 0, %s32
      %s35 = sphi 0, %s33
      %s45 = sphi 0, %s47
      %s48 = sphi 0, %s45
      %s49 = sphi 0, %s48
      %s65 = sphi 0, %s49
      %s71 = sphi 0, %s73
      %s74 = sphi 0, %s71
      %s75 = sphi 0, %s74
      %s91 = sphi 0, %s75
      %s97 = sphi 0, %s99
      %s100 = sphi 0, %s97
      %s101 = sphi 0, %s100
      %s117 = sphi 0, %s101
      %s123 = sphi 0, %s125
      %s126 = sphi 0, %s123
      %s127 = sphi 0, %s126
      %s143 = sphi 0, %s127
      %s149 = sphi 0, %s151
      %s152 = sphi 0, %s149
      %s153 = sphi 0, %s152
      %s169 = sphi 0, %s153
      %s175 = sphi 0, %s177
      %s178 = sphi 0, %s175
      %s179 = sphi 0, %s178
      %s195 = sphi 0, %s179
      %s201 = sphi 0, %s203
      %s204 = sphi 0, %s201
      %s205 = sphi 0, %s204
      %s221 = sphi 0, %s205
      %s227 = sphi 0, %s229
      %s230 = sphi 0, %s227
      %s231 = sphi 0, %s230
      %s247 = sphi 0, %s231
      %s253 = sphi 0, %s255
      %s256 = sphi 0, %s253
      %s257 = sphi 0, %s256
      %s273 = sphi 0, %s257
      %s279 = sphi 0, %s281
      %s282 = sphi 0, %s279
      %s283 = sphi 0, %s282
      %s299 = sphi 0, %s283
      %s307 = sphi 0, %s309
      %s310 = sphi 0, %s307
      %s311 = sphi 0, %s310
      %s327 = sphi 0, %s311
    $region4: #{tpu_custom_call.1} parent=1 // loop_header_branch
      %26 = sbr.rel (%p24) target = $region8
    $region5: #{tpu_custom_call.1} parent=1 // loop_body
      %s28 = ssub.s32 %s23, 1
      %s29 = ssub.s32 %s23, 2
      %s36 = sadd.s32 1, %s31
      %p37 = scmp.ge.s32.totalorder %s36, 2
      %s38 = scalar_select %p37, 0, %s36
      %s39 = sadd.s32 1, %s30
      %s40 = scalar_select %p37, %s39, %s30
      %p41 = scmp.ge.s32.totalorder %s40, 2
      %s42 = scalar_select %p41, 0, %s40
      %s43 = ssub.s32 %s30, %s42
      %p44 = scmp.eq.s32.totalorder %s43, 0
      %s46 = sadd.s32 %s45, 1
      %s47 = scalar_select %p44, %s45, %s46
      %p50 = pneg %p44
      %p51 = scmp.eq.s32.totalorder %s23, 3
      %p52 = por %p50, %p51
      %p53 = scmp.ne.s32.totalorder %s45, %s48
      %p54 = scmp.eq.s32.totalorder %s23, 0
      %p55 = por %p53, %p54
      %p56 = scmp.ne.s32.totalorder %s45, %s48
      %p57 = scmp.eq.s32.totalorder %s28, 3
      %p58 = por %p56, %p57
      %p59 = scmp.ne.s32.totalorder %s48, %s49
      %p60 = scmp.eq.s32.totalorder %s28, 0
      %p61 = por %p59, %p60
      %p62 = scmp.ne.s32.totalorder %s48, %s49
      %p63 = scmp.eq.s32.totalorder %s29, 3
      %p64 = por %p62, %p63
      %p66 = scmp.ne.s32.totalorder %s49, %s65
      %p67 = scmp.eq.s32.totalorder %s29, 0
      %p68 = por %p66, %p67
      %s69 = ssub.s32 %s30, %s42
      %p70 = scmp.eq.s32.totalorder %s69, 0
      %s72 = sadd.s32 %s71, 1
      %s73 = scalar_select %p70, %s71, %s72
      %p76 = pneg %p70
      %p77 = scmp.eq.s32.totalorder %s23, 3
      %p78 = por %p76, %p77
      %p79 = scmp.ne.s32.totalorder %s71, %s74
      %p80 = scmp.eq.s32.totalorder %s23, 0
      %p81 = por %p79, %p80
      %p82 = scmp.ne.s32.totalorder %s71, %s74
      %p83 = scmp.eq.s32.totalorder %s28, 3
      %p84 = por %p82, %p83
      %p85 = scmp.ne.s32.totalorder %s74, %s75
      %p86 = scmp.eq.s32.totalorder %s28, 0
      %p87 = por %p85, %p86
      %p88 = scmp.ne.s32.totalorder %s74, %s75
      %p89 = scmp.eq.s32.totalorder %s29, 3
      %p90 = por %p88, %p89
      %p92 = scmp.ne.s32.totalorder %s75, %s91
      %p93 = scmp.eq.s32.totalorder %s29, 0
      %p94 = por %p92, %p93
      %s95 = ssub.s32 %s31, %s38
      %p96 = scmp.eq.s32.totalorder %s95, 0
      %s98 = sadd.s32 %s97, 1
      %s99 = scalar_select %p96, %s97, %s98
      %p102 = pneg %p96
      %p103 = scmp.eq.s32.totalorder %s23, 3
      %p104 = por %p102, %p103
      %p105 = scmp.ne.s32.totalorder %s97, %s100
      %p106 = scmp.eq.s32.totalorder %s23, 0
      %p107 = por %p105, %p106
      %p108 = scmp.ne.s32.totalorder %s97, %s100
      %p109 = scmp.eq.s32.totalorder %s28, 3
      %p110 = por %p108, %p109
      %p111 = scmp.ne.s32.totalorder %s100, %s101
      %p112 = scmp.eq.s32.totalorder %s28, 0
      %p113 = por %p111, %p112
      %p114 = scmp.ne.s32.totalorder %s100, %s101
      %p115 = scmp.eq.s32.totalorder %s29, 3
      %p116 = por %p114, %p115
      %p118 = scmp.ne.s32.totalorder %s101, %s117
      %p119 = scmp.eq.s32.totalorder %s29, 0
      %p120 = por %p118, %p119
      %s121 = ssub.s32 %s31, %s38
      %p122 = scmp.eq.s32.totalorder %s121, 0
      %s124 = sadd.s32 %s123, 1
      %s125 = scalar_select %p122, %s123, %s124
      %p128 = pneg %p122
      %p129 = scmp.eq.s32.totalorder %s23, 3
      %p130 = por %p128, %p129
      %p131 = scmp.ne.s32.totalorder %s123, %s126
      %p132 = scmp.eq.s32.totalorder %s23, 0
      %p133 = por %p131, %p132
      %p134 = scmp.ne.s32.totalorder %s123, %s126
      %p135 = scmp.eq.s32.totalorder %s28, 3
      %p136 = por %p134, %p135
      %p137 = scmp.ne.s32.totalorder %s126, %s127
      %p138 = scmp.eq.s32.totalorder %s28, 0
      %p139 = por %p137, %p138
      %p140 = scmp.ne.s32.totalorder %s126, %s127
      %p141 = scmp.eq.s32.totalorder %s29, 3
      %p142 = por %p140, %p141
      %p144 = scmp.ne.s32.totalorder %s127, %s143
      %p145 = scmp.eq.s32.totalorder %s29, 0
      %p146 = por %p144, %p145
      %s147 = ssub.s32 %s31, %s38
      %p148 = scmp.eq.s32.totalorder %s147, 0
      %s150 = sadd.s32 %s149, 1
      %s151 = scalar_select %p148, %s149, %s150
      %p154 = pneg %p148
      %p155 = scmp.eq.s32.totalorder %s23, 3
      %p156 = por %p154, %p155
      %p157 = scmp.ne.s32.totalorder %s149, %s152
      %p158 = scmp.eq.s32.totalorder %s23, 0
      %p159 = por %p157, %p158
      %p160 = scmp.ne.s32.totalorder %s149, %s152
      %p161 = scmp.eq.s32.totalorder %s28, 3
      %p162 = por %p160, %p161
      %p163 = scmp.ne.s32.totalorder %s152, %s153
      %p164 = scmp.eq.s32.totalorder %s28, 0
      %p165 = por %p163, %p164
      %p166 = scmp.ne.s32.totalorder %s152, %s153
      %p167 = scmp.eq.s32.totalorder %s29, 3
      %p168 = por %p166, %p167
      %p170 = scmp.ne.s32.totalorder %s153, %s169
      %p171 = scmp.eq.s32.totalorder %s29, 0
      %p172 = por %p170, %p171
      %s173 = ssub.s32 %s31, %s38
      %p174 = scmp.eq.s32.totalorder %s173, 0
      %s176 = sadd.s32 %s175, 1
      %s177 = scalar_select %p174, %s175, %s176
      %p180 = pneg %p174
      %p181 = scmp.eq.s32.totalorder %s23, 3
      %p182 = por %p180, %p181
      %p183 = scmp.ne.s32.totalorder %s175, %s178
      %p184 = scmp.eq.s32.totalorder %s23, 0
      %p185 = por %p183, %p184
      %p186 = scmp.ne.s32.totalorder %s175, %s178
      %p187 = scmp.eq.s32.totalorder %s28, 3
      %p188 = por %p186, %p187
      %p189 = scmp.ne.s32.totalorder %s178, %s179
      %p190 = scmp.eq.s32.totalorder %s28, 0
      %p191 = por %p189, %p190
      %p192 = scmp.ne.s32.totalorder %s178, %s179
      %p193 = scmp.eq.s32.totalorder %s29, 3
      %p194 = por %p192, %p193
      %p196 = scmp.ne.s32.totalorder %s179, %s195
      %p197 = scmp.eq.s32.totalorder %s29, 0
      %p198 = por %p196, %p197
      %s199 = ssub.s32 %s31, %s38
      %p200 = scmp.eq.s32.totalorder %s199, 0
      %s202 = sadd.s32 %s201, 1
      %s203 = scalar_select %p200, %s201, %s202
      %p206 = pneg %p200
      %p207 = scmp.eq.s32.totalorder %s23, 3
      %p208 = por %p206, %p207
      %p209 = scmp.ne.s32.totalorder %s201, %s204
      %p210 = scmp.eq.s32.totalorder %s23, 0
      %p211 = por %p209, %p210
      %p212 = scmp.ne.s32.totalorder %s201, %s204
      %p213 = scmp.eq.s32.totalorder %s28, 3
      %p214 = por %p212, %p213
      %p215 = scmp.ne.s32.totalorder %s204, %s205
      %p216 = scmp.eq.s32.totalorder %s28, 0
      %p217 = por %p215, %p216
      %p218 = scmp.ne.s32.totalorder %s204, %s205
      %p219 = scmp.eq.s32.totalorder %s29, 3
      %p220 = por %p218, %p219
      %p222 = scmp.ne.s32.totalorder %s205, %s221
      %p223 = scmp.eq.s32.totalorder %s29, 0
      %p224 = por %p222, %p223
      %s225 = ssub.s32 %s31, %s38
      %p226 = scmp.eq.s32.totalorder %s225, 0
      %s228 = sadd.s32 %s227, 1
      %s229 = scalar_select %p226, %s227, %s228
      %p232 = pneg %p226
      %p233 = scmp.eq.s32.totalorder %s23, 3
      %p234 = por %p232, %p233
      %p235 = scmp.ne.s32.totalorder %s227, %s230
      %p236 = scmp.eq.s32.totalorder %s23, 0
      %p237 = por %p235, %p236
      %p238 = scmp.ne.s32.totalorder %s227, %s230
      %p239 = scmp.eq.s32.totalorder %s28, 3
      %p240 = por %p238, %p239
      %p241 = scmp.ne.s32.totalorder %s230, %s231
      %p242 = scmp.eq.s32.totalorder %s28, 0
      %p243 = por %p241, %p242
      %p244 = scmp.ne.s32.totalorder %s230, %s231
      %p245 = scmp.eq.s32.totalorder %s29, 3
      %p246 = por %p244, %p245
      %p248 = scmp.ne.s32.totalorder %s231, %s247
      %p249 = scmp.eq.s32.totalorder %s29, 0
      %p250 = por %p248, %p249
      %s251 = ssub.s32 %s31, %s38
      %p252 = scmp.eq.s32.totalorder %s251, 0
      %s254 = sadd.s32 %s253, 1
      %s255 = scalar_select %p252, %s253, %s254
      %p258 = pneg %p252
      %p259 = scmp.eq.s32.totalorder %s23, 3
      %p260 = por %p258, %p259
      %p261 = scmp.ne.s32.totalorder %s253, %s256
      %p262 = scmp.eq.s32.totalorder %s23, 0
      %p263 = por %p261, %p262
      %p264 = scmp.ne.s32.totalorder %s253, %s256
      %p265 = scmp.eq.s32.totalorder %s28, 3
      %p266 = por %p264, %p265
      %p267 = scmp.ne.s32.totalorder %s256, %s257
      %p268 = scmp.eq.s32.totalorder %s28, 0
      %p269 = por %p267, %p268
      %p270 = scmp.ne.s32.totalorder %s256, %s257
      %p271 = scmp.eq.s32.totalorder %s29, 3
      %p272 = por %p270, %p271
      %p274 = scmp.ne.s32.totalorder %s257, %s273
      %p275 = scmp.eq.s32.totalorder %s29, 0
      %p276 = por %p274, %p275
      %s277 = ssub.s32 %s30, %s42
      %p278 = scmp.eq.s32.totalorder %s277, 0
      %s280 = sadd.s32 %s279, 1
      %s281 = scalar_select %p278, %s279, %s280
      %p284 = pneg %p278
      %p285 = scmp.eq.s32.totalorder %s23, 3
      %p286 = por %p284, %p285
      %p287 = scmp.ne.s32.totalorder %s279, %s282
      %p288 = scmp.eq.s32.totalorder %s23, 0
      %p289 = por %p287, %p288
      %p290 = scmp.ne.s32.totalorder %s279, %s282
      %p291 = scmp.eq.s32.totalorder %s28, 3
      %p292 = por %p290, %p291
      %p293 = scmp.ne.s32.totalorder %s282, %s283
      %p294 = scmp.eq.s32.totalorder %s28, 0
      %p295 = por %p293, %p294
      %p296 = scmp.ne.s32.totalorder %s282, %s283
      %p297 = scmp.eq.s32.totalorder %s29, 3
      %p298 = por %p296, %p297
      %p300 = scmp.ne.s32.totalorder %s283, %s299
      %p301 = scmp.eq.s32.totalorder %s29, 0
      %p302 = por %p300, %p301
      %s303 = ssub.s32 %s31, %s38
      %s304 = ssub.s32 %s30, %s42
      %s305 = sor.u32 %s303, %s304
      %p306 = scmp.eq.s32.totalorder %s305, 0
      %s308 = sadd.s32 %s307, 1
      %s309 = scalar_select %p306, %s307, %s308
      %p312 = pneg %p306
      %p313 = scmp.eq.s32.totalorder %s23, 3
      %p314 = por %p312, %p313
      %p315 = scmp.ne.s32.totalorder %s307, %s310
      %p316 = scmp.eq.s32.totalorder %s23, 0
      %p317 = por %p315, %p316
      %p318 = scmp.ne.s32.totalorder %s307, %s310
      %p319 = scmp.eq.s32.totalorder %s28, 3
      %p320 = por %p318, %p319
      %p321 = scmp.ne.s32.totalorder %s310, %s311
      %p322 = scmp.eq.s32.totalorder %s28, 0
      %p323 = por %p321, %p322
      %p324 = scmp.ne.s32.totalorder %s310, %s311
      %p325 = scmp.eq.s32.totalorder %s29, 3
      %p326 = por %p324, %p325
      %p328 = scmp.ne.s32.totalorder %s311, %s327
      %p329 = scmp.eq.s32.totalorder %s29, 0
      %p330 = por %p328, %p329
      %p331 = scmp.le.s32.totalorder 1, %s23
      %p332 = scmp.lt.s32.totalorder %s23, 5
      %p333 = pnand %p331, %p332
      %p334 = pneg %p333
      // Predicated region
      $region9: #{tpu_custom_call.1} parent=5 // pred_check
        _
      $region10: #{tpu_custom_call.1} parent=5 // pred_check_branch
        %336 = sbr.rel (%p333) target = $region12
      $region11: #{tpu_custom_call.1} parent=5 // pred_region
        %s337 = ssub.s32 %s23, 1
      $region12: #{tpu_custom_call.1} parent=5 // pred_fallthru
        _
      %p338 = scmp.lt.s32.totalorder %s23, 4
      // Predicated region
      $region13: #{tpu_custom_call.1} parent=5 // pred_check
        %p339 = pneg %p338
      $region14: #{tpu_custom_call.1} parent=5 // pred_check_branch
        %341 = sbr.rel (%p339) target = $region16
      $region15: #{tpu_custom_call.1} parent=5 // pred_region
        // Predicated region
        $region17: #{tpu_custom_call.1} parent=15 // pred_check
          %p342 = pneg %p55
        $region18: #{tpu_custom_call.1} parent=15 // pred_check_branch
          %344 = sbr.rel (%p342) target = $region20
        $region19: #{tpu_custom_call.1} parent=15 // pred_region
          %p345 = scmp.lt.s32.totalorder %s30, 1
          %s346 = scalar_select %p345, %s30, 1
          %s347 = scalar_lea.vmem %s0, %s346
        $region20: #{tpu_custom_call.1} parent=15 // pred_fallthru
          _
        // Predicated region
        $region21: #{tpu_custom_call.1} parent=15 // pred_check
          %p348 = pneg %p81
        $region22: #{tpu_custom_call.1} parent=15 // pred_check_branch
          %350 = sbr.rel (%p348) target = $region24
        $region23: #{tpu_custom_call.1} parent=15 // pred_region
          %p351 = scmp.lt.s32.totalorder %s30, 1
          %s352 = scalar_select %p351, %s30, 1
          %s353 = smul.addr %s352, 8
          %s354 = scalar_lea.vmem %s1, %s353
        $region24: #{tpu_custom_call.1} parent=15 // pred_fallthru
          _
        // Predicated region
        $region25: #{tpu_custom_call.1} parent=15 // pred_check
          %p355 = pneg %p107
        $region26: #{tpu_custom_call.1} parent=15 // pred_check_branch
          %357 = sbr.rel (%p355) target = $region28
        $region27: #{tpu_custom_call.1} parent=15 // pred_region
          %p358 = scmp.lt.s32.totalorder %s31, 1
          %s359 = scalar_select %p358, %s31, 1
          %s360 = smul.addr %s359, 16
          %s361 = smul.addr %s360, 4
          %s362 = scalar_lea.vmem %s2, %s361
        $region28: #{tpu_custom_call.1} parent=15 // pred_fallthru
          _
        // Predicated region
        $region29: #{tpu_custom_call.1} parent=15 // pred_check
          %p363 = pneg %p133
        $region30: #{tpu_custom_call.1} parent=15 // pred_check_branch
          %365 = sbr.rel (%p363) target = $region32
        $region31: #{tpu_custom_call.1} parent=15 // pred_region
          %p366 = scmp.lt.s32.totalorder %s31, 1
          %s367 = scalar_select %p366, %s31, 1
          %s368 = smul.addr %s367, 4
          %s369 = scalar_lea.vmem %s3, %s368
        $region32: #{tpu_custom_call.1} parent=15 // pred_fallthru
          _
        // Predicated region
        $region33: #{tpu_custom_call.1} parent=15 // pred_check
          %p370 = pneg %p159
        $region34: #{tpu_custom_call.1} parent=15 // pred_check_branch
          %372 = sbr.rel (%p370) target = $region36
        $region35: #{tpu_custom_call.1} parent=15 // pred_region
          %p373 = scmp.lt.s32.totalorder %s31, 1
          %s374 = scalar_select %p373, %s31, 1
          %s375 = smul.addr %s374, 4
          %s376 = smul.addr %s375, 4
          %s377 = scalar_lea.vmem %s4, %s376
        $region36: #{tpu_custom_call.1} parent=15 // pred_fallthru
          _
        // Predicated region
        $region37: #{tpu_custom_call.1} parent=15 // pred_check
          %p378 = pneg %p185
        $region38: #{tpu_custom_call.1} parent=15 // pred_check_branch
          %380 = sbr.rel (%p378) target = $region40
        $region39: #{tpu_custom_call.1} parent=15 // pred_region
          %p381 = scmp.lt.s32.totalorder %s31, 1
          %s382 = scalar_select %p381, %s31, 1
          %s383 = smul.addr %s382, 8
          %s384 = scalar_lea.vmem %s5, %s383
        $region40: #{tpu_custom_call.1} parent=15 // pred_fallthru
          _
        // Predicated region
        $region41: #{tpu_custom_call.1} parent=15 // pred_check
          %p385 = pneg %p211
        $region42: #{tpu_custom_call.1} parent=15 // pred_check_branch
          %387 = sbr.rel (%p385) target = $region44
        $region43: #{tpu_custom_call.1} parent=15 // pred_region
          %p388 = scmp.lt.s32.totalorder %s31, 1
          %s389 = scalar_select %p388, %s31, 1
          %s390 = smul.addr %s389, 4
          %s391 = smul.addr %s390, 4
          %s392 = scalar_lea.vmem %s6, %s391
        $region44: #{tpu_custom_call.1} parent=15 // pred_fallthru
          _
        // Predicated region
        $region45: #{tpu_custom_call.1} parent=15 // pred_check
          %p393 = pneg %p237
        $region46: #{tpu_custom_call.1} parent=15 // pred_check_branch
          %395 = sbr.rel (%p393) target = $region48
        $region47: #{tpu_custom_call.1} parent=15 // pred_region
          %p396 = scmp.lt.s32.totalorder %s31, 1
          %s397 = scalar_select %p396, %s31, 1
          %s398 = scalar_lea.vmem %s7, %s397
        $region48: #{tpu_custom_call.1} parent=15 // pred_fallthru
          _
        // Predicated region
        $region49: #{tpu_custom_call.1} parent=15 // pred_check
          %p399 = pneg %p263
        $region50: #{tpu_custom_call.1} parent=15 // pred_check_branch
          %401 = sbr.rel (%p399) target = $region52
        $region51: #{tpu_custom_call.1} parent=15 // pred_region
          %p402 = scmp.lt.s32.totalorder %s31, 1
          %s403 = scalar_select %p402, %s31, 1
          %s404 = smul.addr %s403, 8
          %s405 = smul.addr %s404, 4
          %s406 = scalar_lea.vmem %s8, %s405
        $region52: #{tpu_custom_call.1} parent=15 // pred_fallthru
          _
      $region16: #{tpu_custom_call.1} parent=5 // pred_fallthru
        _
      %p407 = scmp.le.s32.totalorder 1, %s23
      %p408 = scmp.lt.s32.totalorder %s23, 5
      %p409 = pnand %p407, %p408
      %p410 = pneg %p409
      // Predicated region
      $region53: #{tpu_custom_call.1} parent=5 // pred_check
        _
      $region54: #{tpu_custom_call.1} parent=5 // pred_check_branch
        %412 = sbr.rel (%p409) target = $region56
      $region55: #{tpu_custom_call.1} parent=5 // pred_region
        %s413 = ssub.s32 %s23, 1
        %p414 = scmp.lt.s32.totalorder %s32, 1
        %s415 = scalar_select %p414, %s32, 1
        %s416 = scalar_lea.vmem %s0, %s415
        %p417 = pneg %p61
        %p418 = pneg %p58
        %p419 = scmp.lt.s32.totalorder %s32, 1
        %s420 = scalar_select %p419, %s32, 1
        %s421 = smul.addr %s420, 8
        %s422 = scalar_lea.vmem %s1, %s421
        %p423 = pneg %p87
        %p424 = pneg %p84
        %p425 = scmp.lt.s32.totalorder %s33, 1
        %s426 = scalar_select %p425, %s33, 1
        %s427 = smul.addr %s426, 16
        %s428 = smul.addr %s427, 4
        %s429 = scalar_lea.vmem %s2, %s428
        %p430 = pneg %p113
        %p431 = pneg %p110
        %p432 = scmp.lt.s32.totalorder %s33, 1
        %s433 = scalar_select %p432, %s33, 1
        %s434 = smul.addr %s433, 4
        %s435 = scalar_lea.vmem %s3, %s434
        %p436 = pneg %p139
        %p437 = pneg %p136
        %p438 = scmp.lt.s32.totalorder %s33, 1
        %s439 = scalar_select %p438, %s33, 1
        %s440 = smul.addr %s439, 4
        %s441 = smul.addr %s440, 4
        %s442 = scalar_lea.vmem %s4, %s441
        %p443 = pneg %p165
        %p444 = pneg %p162
        %p445 = scmp.lt.s32.totalorder %s33, 1
        %s446 = scalar_select %p445, %s33, 1
        %s447 = smul.addr %s446, 8
        %s448 = scalar_lea.vmem %s5, %s447
        %p449 = pneg %p191
        %p450 = pneg %p188
        %p451 = scmp.lt.s32.totalorder %s33, 1
        %s452 = scalar_select %p451, %s33, 1
        %s453 = smul.addr %s452, 4
        %s454 = smul.addr %s453, 4
        %s455 = scalar_lea.vmem %s6, %s454
        %p456 = pneg %p217
        %p457 = pneg %p214
        %p458 = scmp.lt.s32.totalorder %s33, 1
        %s459 = scalar_select %p458, %s33, 1
        %s460 = scalar_lea.vmem %s7, %s459
        %p461 = pneg %p243
        %p462 = pneg %p240
        %p463 = scmp.lt.s32.totalorder %s33, 1
        %s464 = scalar_select %p463, %s33, 1
        %s465 = smul.addr %s464, 8
        %s466 = smul.addr %s465, 4
        %s467 = scalar_lea.vmem %s8, %s466
        %p468 = pneg %p269
        %p469 = pneg %p266
        %p470 = pneg %p295
        %p471 = pneg %p292
        %s472 = sand.u32 %s282, 1
        %s473 = scalar_lea.sflag [#allocation3], %s472
        %s474 = sand.u32 %s282, 1
        %s475 = smul.addr %s474, 8
        %s476 = scalar_lea.vmem [#allocation2], %s475
        %p477 = pneg %p323
        %p478 = pneg %p320
        %s479 = sand.u32 %s310, 1
        %s480 = scalar_lea.sflag [#allocation5], %s479
        %s481 = sand.u32 %s310, 1
        %s482 = smul.addr %s481, 32
        %s483 = scalar_lea.vmem [#allocation4], %s482
        %p484 = scmp.lt.s32.totalorder %s32, 1
        %s485 = scalar_select %p484, %s32, 1
        %s486 = scalar_lea.vmem %s0, %s485
        %p487 = scmp.lt.s32.totalorder %s32, 1
        %s488 = scalar_select %p487, %s32, 1
        %s489 = smul.addr %s488, 8
        %s490 = scalar_lea.vmem %s1, %s489
        %p491 = scmp.lt.s32.totalorder %s33, 1
        %s492 = scalar_select %p491, %s33, 1
        %s493 = smul.addr %s492, 16
        %s494 = smul.addr %s493, 4
        %s495 = scalar_lea.vmem %s2, %s494
        %p496 = scmp.lt.s32.totalorder %s33, 1
        %s497 = scalar_select %p496, %s33, 1
        %s498 = smul.addr %s497, 4
        %s499 = scalar_lea.vmem %s3, %s498
        %p500 = scmp.lt.s32.totalorder %s33, 1
        %s501 = scalar_select %p500, %s33, 1
        %s502 = smul.addr %s501, 4
        %s503 = smul.addr %s502, 4
        %s504 = scalar_lea.vmem %s4, %s503
        %p505 = scmp.lt.s32.totalorder %s33, 1
        %s506 = scalar_select %p505, %s33, 1
        %s507 = smul.addr %s506, 8
        %s508 = scalar_lea.vmem %s5, %s507
        %p509 = scmp.lt.s32.totalorder %s33, 1
        %s510 = scalar_select %p509, %s33, 1
        %s511 = smul.addr %s510, 4
        %s512 = smul.addr %s511, 4
        %s513 = scalar_lea.vmem %s6, %s512
        %p514 = scmp.lt.s32.totalorder %s33, 1
        %s515 = scalar_select %p514, %s33, 1
        %s516 = scalar_lea.vmem %s7, %s515
        %p517 = scmp.lt.s32.totalorder %s33, 1
        %s518 = scalar_select %p517, %s33, 1
        %s519 = smul.addr %s518, 8
        %s520 = smul.addr %s519, 4
        %s521 = scalar_lea.vmem %s8, %s520
        %p523 = scmp.eq.s32.totalorder %s33, 0
        // Predicated region
        $region57: #{tpu_custom_call.1} parent=55 // pred_check
          %p524 = pneg %p523
        $region58: #{tpu_custom_call.1} parent=55 // pred_check_branch
          %526 = sbr.rel (%p524) target = $region60
        $region59: #{tpu_custom_call.1} parent=55 // pred_region
          %v527 = vld [vmem:[%s490] sm:$0xff]
          %vm528 = vcmask 261120
          %529 = vst.msk [vmem:[%s476] sm:$0xff] %vm528, %v527
        $region60: #{tpu_custom_call.1} parent=55 // pred_fallthru
          _
        %v530 = vld [vmem:[%s476] sm:$0xff]
        %v531 = vpack.c.bf16 %v530, %v530
        %v532 = vld [vmem:[%s508] sm:$0xff]
        %v533 = vld [vmem:[%s495] sm:$0xf]
        %v534 = vld [vmem:[%s495 + $0x4] sm:$0xf]
        %v535 = vld [vmem:[%s495 + $0x8] sm:$0xf]
        %v536 = vld [vmem:[%s495 + $0xc] sm:$0xf]
        %v537 = vld [vmem:[%s495 + $0x10] sm:$0xf]
        %v538 = vld [vmem:[%s495 + $0x14] sm:$0xf]
        %v539 = vld [vmem:[%s495 + $0x18] sm:$0xf]
        %v540 = vld [vmem:[%s495 + $0x1c] sm:$0xf]
        %v541 = vld [vmem:[%s495 + $0x20] sm:$0xf]
        %v542 = vld [vmem:[%s495 + $0x24] sm:$0xf]
        %v543 = vld [vmem:[%s495 + $0x28] sm:$0xf]
        %v544 = vld [vmem:[%s495 + $0x2c] sm:$0xf]
        %v545 = vld [vmem:[%s495 + $0x30] sm:$0xf]
        %v546 = vld [vmem:[%s495 + $0x34] sm:$0xf]
        %v547 = vld [vmem:[%s495 + $0x38] sm:$0xf]
        %v548 = vld [vmem:[%s495 + $0x3c] sm:$0xf]
        %v549 = vld [vmem:[%s499] sm:$0x1]
        %v550 = vld [vmem:[%s499 + $0x1] sm:$0x1]
        %v551 = vld [vmem:[%s499 + $0x2] sm:$0x1]
        %v552 = vld [vmem:[%s499 + $0x3] sm:$0x1]
        %v557 = vlaneseq
        %v558 = vshrl.u32 %v557, 7
        %v559 = vsub.s32 0, %v558
        %v560 = vrot.slane %v549, %v559
        %v561 = vlaneseq
        %v562 = vshrl.u32 %v561, 7
        %v563 = vsub.s32 0, %v562
        %v564 = vrot.slane %v550, %v563
        %v565 = vlaneseq
        %v566 = vshrl.u32 %v565, 7
        %v567 = vsub.s32 0, %v566
        %v568 = vrot.slane %v551, %v567
        %v569 = vlaneseq
        %v570 = vshrl.u32 %v569, 7
        %v571 = vsub.s32 0, %v570
        %v572 = vrot.slane %v552, %v571
        %v581 = vunpack.c.l.b16 %v533
        %v582 = vunpack.c.l.b16 %v534
        %v583 = vunpack.c.l.b16 %v535
        %v584 = vunpack.c.l.b16 %v536
        %v585 = vpack.c.b16 %v582, %v581
        %v586 = vpack.c.b16 %v584, %v583
        %vm589 = vcmask 261120
        %v591 = vsel %vm589, %v531, 0
        %593 = vmatprep.subr.bf16.mxu0 0
        %594 = vmatpush1.bf16.msra.mxu0 %v585
        %595 = vmatprep.subr.bf16.mxu0 0
        %596 = vmatpush1.bf16.msra.mxu0 %v586
        %597 = vmatprep.subr.bf16.mxu0 0
        %598 = vmatpush1.bf16.msra.mxu0 0
        %599 = vmatprep.subr.bf16.mxu0 0
        %600 = vmatpush1.bf16.msra.mxu0 0
        %601 = vmatprep.subr.bf16.mxu0 0
        %602 = vmatpush1.bf16.msra.mxu0 0
        %603 = vmatprep.subr.bf16.mxu0 0
        %604 = vmatpush1.bf16.msra.mxu0 0
        %605 = vmatprep.subr.bf16.mxu0 0
        %606 = vmatpush1.bf16.msra.mxu0 0
        %607 = vmatprep.subr.bf16.mxu0 0
        %608 = vmatpush1.bf16.msra.mxu0 0
        %609 = vmatprep.subr.bf16.mxu0 0
        %610 = vmatpush1.bf16.msra.mxu0 0
        %611 = vmatprep.subr.bf16.mxu0 0
        %612 = vmatpush1.bf16.msra.mxu0 0
        %613 = vmatprep.subr.bf16.mxu0 0
        %614 = vmatpush1.bf16.msra.mxu0 0
        %615 = vmatprep.subr.bf16.mxu0 0
        %616 = vmatpush1.bf16.msra.mxu0 0
        %617 = vmatprep.subr.bf16.mxu0 0
        %618 = vmatpush1.bf16.msra.mxu0 0
        %619 = vmatprep.subr.bf16.mxu0 0
        %620 = vmatpush1.bf16.msra.mxu0 0
        %621 = vmatprep.subr.bf16.mxu0 0
        %622 = vmatpush1.bf16.msra.mxu0 0
        %623 = vmatprep.subr.bf16.mxu0 0
        %624 = vmatpush1.bf16.msra.mxu0 0
        %625 = vmatprep.mubr.bf16.mxu0 0
        %626 = vmatmul.mubr.bf16.gmra.mrb[0].mxu0 %v591
        %v627 = vpop.f32.mrb[0].mxu0
        %v628 = vadd.f32 %v560, %v627
        %v629 = vpop.f32.mrb[0].mxu0
        %v630 = vpop.f32.mrb[0].mxu0
        %v631 = vpop.f32.mrb[0].mxu0
        %632 = vdwg.mxu0
        %v637 = vunpack.c.l.b16 %v537
        %v638 = vunpack.c.l.b16 %v538
        %v639 = vunpack.c.l.b16 %v539
        %v640 = vunpack.c.l.b16 %v540
        %v641 = vpack.c.b16 %v638, %v637
        %v642 = vpack.c.b16 %v640, %v639
        %645 = vmatprep.subr.bf16.mxu0 0
        %646 = vmatpush1.bf16.msra.mxu0 %v641
        %647 = vmatprep.subr.bf16.mxu0 0
        %648 = vmatpush1.bf16.msra.mxu0 %v642
        %649 = vmatprep.subr.bf16.mxu0 0
        %650 = vmatpush1.bf16.msra.mxu0 0
        %651 = vmatprep.subr.bf16.mxu0 0
        %652 = vmatpush1.bf16.msra.mxu0 0
        %653 = vmatprep.subr.bf16.mxu0 0
        %654 = vmatpush1.bf16.msra.mxu0 0
        %655 = vmatprep.subr.bf16.mxu0 0
        %656 = vmatpush1.bf16.msra.mxu0 0
        %657 = vmatprep.subr.bf16.mxu0 0
        %658 = vmatpush1.bf16.msra.mxu0 0
        %659 = vmatprep.subr.bf16.mxu0 0
        %660 = vmatpush1.bf16.msra.mxu0 0
        %661 = vmatprep.subr.bf16.mxu0 0
        %662 = vmatpush1.bf16.msra.mxu0 0
        %663 = vmatprep.subr.bf16.mxu0 0
        %664 = vmatpush1.bf16.msra.mxu0 0
        %665 = vmatprep.subr.bf16.mxu0 0
        %666 = vmatpush1.bf16.msra.mxu0 0
        %667 = vmatprep.subr.bf16.mxu0 0
        %668 = vmatpush1.bf16.msra.mxu0 0
        %669 = vmatprep.subr.bf16.mxu0 0
        %670 = vmatpush1.bf16.msra.mxu0 0
        %671 = vmatprep.subr.bf16.mxu0 0
        %672 = vmatpush1.bf16.msra.mxu0 0
        %673 = vmatprep.subr.bf16.mxu0 0
        %674 = vmatpush1.bf16.msra.mxu0 0
        %675 = vmatprep.subr.bf16.mxu0 0
        %676 = vmatpush1.bf16.msra.mxu0 0
        %677 = vmatprep.mubr.bf16.mxu0 0
        %678 = vmatmul.mubr.bf16.gmra.mrb[0].mxu0 %v591
        %v679 = vpop.f32.mrb[0].mxu0
        %v680 = vadd.f32 %v564, %v679
        %v681 = vpop.f32.mrb[0].mxu0
        %v682 = vpop.f32.mrb[0].mxu0
        %v683 = vpop.f32.mrb[0].mxu0
        %684 = vdwg.mxu0
        %v689 = vunpack.c.l.b16 %v541
        %v690 = vunpack.c.l.b16 %v542
        %v691 = vunpack.c.l.b16 %v543
        %v692 = vunpack.c.l.b16 %v544
        %v693 = vpack.c.b16 %v690, %v689
        %v694 = vpack.c.b16 %v692, %v691
        %697 = vmatprep.subr.bf16.mxu0 0
        %698 = vmatpush1.bf16.msra.mxu0 %v693
        %699 = vmatprep.subr.bf16.mxu0 0
        %700 = vmatpush1.bf16.msra.mxu0 %v694
        %701 = vmatprep.subr.bf16.mxu0 0
        %702 = vmatpush1.bf16.msra.mxu0 0
        %703 = vmatprep.subr.bf16.mxu0 0
        %704 = vmatpush1.bf16.msra.mxu0 0
        %705 = vmatprep.subr.bf16.mxu0 0
        %706 = vmatpush1.bf16.msra.mxu0 0
        %707 = vmatprep.subr.bf16.mxu0 0
        %708 = vmatpush1.bf16.msra.mxu0 0
        %709 = vmatprep.subr.bf16.mxu0 0
        %710 = vmatpush1.bf16.msra.mxu0 0
        %711 = vmatprep.subr.bf16.mxu0 0
        %712 = vmatpush1.bf16.msra.mxu0 0
        %713 = vmatprep.subr.bf16.mxu0 0
        %714 = vmatpush1.bf16.msra.mxu0 0
        %715 = vmatprep.subr.bf16.mxu0 0
        %716 = vmatpush1.bf16.msra.mxu0 0
        %717 = vmatprep.subr.bf16.mxu0 0
        %718 = vmatpush1.bf16.msra.mxu0 0
        %719 = vmatprep.subr.bf16.mxu0 0
        %720 = vmatpush1.bf16.msra.mxu0 0
        %721 = vmatprep.subr.bf16.mxu0 0
        %722 = vmatpush1.bf16.msra.mxu0 0
        %723 = vmatprep.subr.bf16.mxu0 0
        %724 = vmatpush1.bf16.msra.mxu0 0
        %725 = vmatprep.subr.bf16.mxu0 0
        %726 = vmatpush1.bf16.msra.mxu0 0
        %727 = vmatprep.subr.bf16.mxu0 0
        %728 = vmatpush1.bf16.msra.mxu0 0
        %729 = vmatprep.mubr.bf16.mxu0 0
        %730 = vmatmul.mubr.bf16.gmra.mrb[0].mxu0 %v591
        %v731 = vpop.f32.mrb[0].mxu0
        %v732 = vadd.f32 %v568, %v731
        %v733 = vpop.f32.mrb[0].mxu0
        %v734 = vpop.f32.mrb[0].mxu0
        %v735 = vpop.f32.mrb[0].mxu0
        %736 = vdwg.mxu0
        %v741 = vunpack.c.l.b16 %v545
        %v742 = vunpack.c.l.b16 %v546
        %v743 = vunpack.c.l.b16 %v547
        %v744 = vunpack.c.l.b16 %v548
        %v745 = vpack.c.b16 %v742, %v741
        %v746 = vpack.c.b16 %v744, %v743
        %749 = vmatprep.subr.bf16.mxu0 0
        %750 = vmatpush1.bf16.msra.mxu0 %v745
        %751 = vmatprep.subr.bf16.mxu0 0
        %752 = vmatpush1.bf16.msra.mxu0 %v746
        %753 = vmatprep.subr.bf16.mxu0 0
        %754 = vmatpush1.bf16.msra.mxu0 0
        %755 = vmatprep.subr.bf16.mxu0 0
        %756 = vmatpush1.bf16.msra.mxu0 0
        %757 = vmatprep.subr.bf16.mxu0 0
        %758 = vmatpush1.bf16.msra.mxu0 0
        %759 = vmatprep.subr.bf16.mxu0 0
        %760 = vmatpush1.bf16.msra.mxu0 0
        %761 = vmatprep.subr.bf16.mxu0 0
        %762 = vmatpush1.bf16.msra.mxu0 0
        %763 = vmatprep.subr.bf16.mxu0 0
        %764 = vmatpush1.bf16.msra.mxu0 0
        %765 = vmatprep.subr.bf16.mxu0 0
        %766 = vmatpush1.bf16.msra.mxu0 0
        %767 = vmatprep.subr.bf16.mxu0 0
        %768 = vmatpush1.bf16.msra.mxu0 0
        %769 = vmatprep.subr.bf16.mxu0 0
        %770 = vmatpush1.bf16.msra.mxu0 0
        %771 = vmatprep.subr.bf16.mxu0 0
        %772 = vmatpush1.bf16.msra.mxu0 0
        %773 = vmatprep.subr.bf16.mxu0 0
        %774 = vmatpush1.bf16.msra.mxu0 0
        %775 = vmatprep.subr.bf16.mxu0 0
        %776 = vmatpush1.bf16.msra.mxu0 0
        %777 = vmatprep.subr.bf16.mxu0 0
        %778 = vmatpush1.bf16.msra.mxu0 0
        %779 = vmatprep.subr.bf16.mxu0 0
        %780 = vmatpush1.bf16.msra.mxu0 0
        %781 = vmatprep.mubr.bf16.mxu0 0
        %782 = vmatmul.mubr.bf16.gmra.mrb[0].mxu0 %v591
        %v783 = vpop.f32.mrb[0].mxu0
        %v784 = vadd.f32 %v572, %v783
        %v785 = vpop.f32.mrb[0].mxu0
        %v786 = vpop.f32.mrb[0].mxu0
        %v787 = vpop.f32.mrb[0].mxu0
        %788 = vdwg.mxu0
        %v789 = vpack.c.bf16 %v628, %v628
        %v790 = vpack.c.bf16 %v680, %v680
        %v791 = vpack.c.bf16 %v732, %v732
        %v792 = vpack.c.bf16 %v784, %v784
        %v793 = vld [vmem:[%s486] sm:$0x1]
        %v795 = vlaneseq
        %v796 = vshrl.u32 %v795, 7
        %v797 = vsub.s32 0, %v796
        %v798 = vrot.slane %v793, %v797
        %801 = vrot.lane.b32.xlu0 %v789, 120
        %v802 = vpop.permute.xlu0 %801
        %vm803 = vcmask 64512
        %v805 = vsel %vm803, %v789, 0
        %v808 = vsel %vm803, %v802, 0
        %810 = vmatprep.subr.bf16.mxu0 0
        %811 = vmatpush1.bf16.xpose.msra.mxu0 %v808
        %812 = vmatprep.subr.bf16.mxu0 0
        %813 = vmatpush1.bf16.xpose.msra.mxu0 0
        %814 = vmatprep.subr.bf16.mxu0 0
        %815 = vmatpush1.bf16.xpose.msra.mxu0 0
        %816 = vmatprep.subr.bf16.mxu0 0
        %817 = vmatpush1.bf16.xpose.msra.mxu0 0
        %818 = vmatprep.subr.bf16.mxu0 0
        %819 = vmatpush1.bf16.xpose.msra.mxu0 0
        %820 = vmatprep.subr.bf16.mxu0 0
        %821 = vmatpush1.bf16.xpose.msra.mxu0 0
        %822 = vmatprep.subr.bf16.mxu0 0
        %823 = vmatpush1.bf16.xpose.msra.mxu0 0
        %824 = vmatprep.subr.bf16.mxu0 0
        %825 = vmatpush1.bf16.xpose.msra.mxu0 0
        %826 = vmatprep.subr.bf16.mxu0 0
        %827 = vmatpush1.bf16.xpose.msra.mxu0 0
        %828 = vmatprep.subr.bf16.mxu0 0
        %829 = vmatpush1.bf16.xpose.msra.mxu0 0
        %830 = vmatprep.subr.bf16.mxu0 0
        %831 = vmatpush1.bf16.xpose.msra.mxu0 0
        %832 = vmatprep.subr.bf16.mxu0 0
        %833 = vmatpush1.bf16.xpose.msra.mxu0 0
        %834 = vmatprep.subr.bf16.mxu0 0
        %835 = vmatpush1.bf16.xpose.msra.mxu0 0
        %836 = vmatprep.subr.bf16.mxu0 0
        %837 = vmatpush1.bf16.xpose.msra.mxu0 0
        %838 = vmatprep.subr.bf16.mxu0 0
        %839 = vmatpush1.bf16.xpose.msra.mxu0 0
        %840 = vmatprep.subr.bf16.mxu0 0
        %841 = vmatpush1.bf16.xpose.msra.mxu0 0
        %842 = vmatprep.mubr.bf16.mxu0 0
        %843 = vmatmul.mubr.bf16.gmra.mrb[0].mxu0 %v805
        %v844 = vpop.f32.mrb[0].mxu0
        %v845 = vadd.f32 %v798, %v844
        %v846 = vpop.f32.mrb[0].mxu0
        %v847 = vpop.f32.mrb[0].mxu0
        %v848 = vpop.f32.mrb[0].mxu0
        %849 = vdwg.mxu0
        %851 = vrot.lane.b32.xlu0 %v790, 120
        %v852 = vpop.permute.xlu0 %851
        %v854 = vsel %vm803, %v790, 0
        %v857 = vsel %vm803, %v852, 0
        %859 = vmatprep.subr.bf16.mxu0 0
        %860 = vmatpush1.bf16.xpose.msra.mxu0 %v857
        %861 = vmatprep.subr.bf16.mxu0 0
        %862 = vmatpush1.bf16.xpose.msra.mxu0 0
        %863 = vmatprep.subr.bf16.mxu0 0
        %864 = vmatpush1.bf16.xpose.msra.mxu0 0
        %865 = vmatprep.subr.bf16.mxu0 0
        %866 = vmatpush1.bf16.xpose.msra.mxu0 0
        %867 = vmatprep.subr.bf16.mxu0 0
        %868 = vmatpush1.bf16.xpose.msra.mxu0 0
        %869 = vmatprep.subr.bf16.mxu0 0
        %870 = vmatpush1.bf16.xpose.msra.mxu0 0
        %871 = vmatprep.subr.bf16.mxu0 0
        %872 = vmatpush1.bf16.xpose.msra.mxu0 0
        %873 = vmatprep.subr.bf16.mxu0 0
        %874 = vmatpush1.bf16.xpose.msra.mxu0 0
        %875 = vmatprep.subr.bf16.mxu0 0
        %876 = vmatpush1.bf16.xpose.msra.mxu0 0
        %877 = vmatprep.subr.bf16.mxu0 0
        %878 = vmatpush1.bf16.xpose.msra.mxu0 0
        %879 = vmatprep.subr.bf16.mxu0 0
        %880 = vmatpush1.bf16.xpose.msra.mxu0 0
        %881 = vmatprep.subr.bf16.mxu0 0
        %882 = vmatpush1.bf16.xpose.msra.mxu0 0
        %883 = vmatprep.subr.bf16.mxu0 0
        %884 = vmatpush1.bf16.xpose.msra.mxu0 0
        %885 = vmatprep.subr.bf16.mxu0 0
        %886 = vmatpush1.bf16.xpose.msra.mxu0 0
        %887 = vmatprep.subr.bf16.mxu0 0
        %888 = vmatpush1.bf16.xpose.msra.mxu0 0
        %889 = vmatprep.subr.bf16.mxu0 0
        %890 = vmatpush1.bf16.xpose.msra.mxu0 0
        %891 = vmatprep.mubr.bf16.mxu0 0
        %892 = vmatmul.mubr.bf16.gmra.mrb[0].mxu0 %v854
        %v893 = vpop.f32.mrb[0].mxu0
        %v894 = vadd.f32 %v798, %v893
        %v895 = vpop.f32.mrb[0].mxu0
        %v896 = vpop.f32.mrb[0].mxu0
        %v897 = vpop.f32.mrb[0].mxu0
        %898 = vdwg.mxu0
        %900 = vrot.lane.b32.xlu0 %v791, 120
        %v901 = vpop.permute.xlu0 %900
        %v903 = vsel %vm803, %v791, 0
        %v906 = vsel %vm803, %v901, 0
        %908 = vmatprep.subr.bf16.mxu0 0
        %909 = vmatpush1.bf16.xpose.msra.mxu0 %v906
        %910 = vmatprep.subr.bf16.mxu0 0
        %911 = vmatpush1.bf16.xpose.msra.mxu0 0
        %912 = vmatprep.subr.bf16.mxu0 0
        %913 = vmatpush1.bf16.xpose.msra.mxu0 0
        %914 = vmatprep.subr.bf16.mxu0 0
        %915 = vmatpush1.bf16.xpose.msra.mxu0 0
        %916 = vmatprep.subr.bf16.mxu0 0
        %917 = vmatpush1.bf16.xpose.msra.mxu0 0
        %918 = vmatprep.subr.bf16.mxu0 0
        %919 = vmatpush1.bf16.xpose.msra.mxu0 0
        %920 = vmatprep.subr.bf16.mxu0 0
        %921 = vmatpush1.bf16.xpose.msra.mxu0 0
        %922 = vmatprep.subr.bf16.mxu0 0
        %923 = vmatpush1.bf16.xpose.msra.mxu0 0
        %924 = vmatprep.subr.bf16.mxu0 0
        %925 = vmatpush1.bf16.xpose.msra.mxu0 0
        %926 = vmatprep.subr.bf16.mxu0 0
        %927 = vmatpush1.bf16.xpose.msra.mxu0 0
        %928 = vmatprep.subr.bf16.mxu0 0
        %929 = vmatpush1.bf16.xpose.msra.mxu0 0
        %930 = vmatprep.subr.bf16.mxu0 0
        %931 = vmatpush1.bf16.xpose.msra.mxu0 0
        %932 = vmatprep.subr.bf16.mxu0 0
        %933 = vmatpush1.bf16.xpose.msra.mxu0 0
        %934 = vmatprep.subr.bf16.mxu0 0
        %935 = vmatpush1.bf16.xpose.msra.mxu0 0
        %936 = vmatprep.subr.bf16.mxu0 0
        %937 = vmatpush1.bf16.xpose.msra.mxu0 0
        %938 = vmatprep.subr.bf16.mxu0 0
        %939 = vmatpush1.bf16.xpose.msra.mxu0 0
        %940 = vmatprep.mubr.bf16.mxu0 0
        %941 = vmatmul.mubr.bf16.gmra.mrb[0].mxu0 %v903
        %v942 = vpop.f32.mrb[0].mxu0
        %v943 = vadd.f32 %v798, %v942
        %v944 = vpop.f32.mrb[0].mxu0
        %v945 = vpop.f32.mrb[0].mxu0
        %v946 = vpop.f32.mrb[0].mxu0
        %947 = vdwg.mxu0
        %949 = vrot.lane.b32.xlu0 %v792, 120
        %v950 = vpop.permute.xlu0 %949
        %v952 = vsel %vm803, %v792, 0
        %v955 = vsel %vm803, %v950, 0
        %957 = vmatprep.subr.bf16.mxu0 0
        %958 = vmatpush1.bf16.xpose.msra.mxu0 %v955
        %959 = vmatprep.subr.bf16.mxu0 0
        %960 = vmatpush1.bf16.xpose.msra.mxu0 0
        %961 = vmatprep.subr.bf16.mxu0 0
        %962 = vmatpush1.bf16.xpose.msra.mxu0 0
        %963 = vmatprep.subr.bf16.mxu0 0
        %964 = vmatpush1.bf16.xpose.msra.mxu0 0
        %965 = vmatprep.subr.bf16.mxu0 0
        %966 = vmatpush1.bf16.xpose.msra.mxu0 0
        %967 = vmatprep.subr.bf16.mxu0 0
        %968 = vmatpush1.bf16.xpose.msra.mxu0 0
        %969 = vmatprep.subr.bf16.mxu0 0
        %970 = vmatpush1.bf16.xpose.msra.mxu0 0
        %971 = vmatprep.subr.bf16.mxu0 0
        %972 = vmatpush1.bf16.xpose.msra.mxu0 0
        %973 = vmatprep.subr.bf16.mxu0 0
        %974 = vmatpush1.bf16.xpose.msra.mxu0 0
        %975 = vmatprep.subr.bf16.mxu0 0
        %976 = vmatpush1.bf16.xpose.msra.mxu0 0
        %977 = vmatprep.subr.bf16.mxu0 0
        %978 = vmatpush1.bf16.xpose.msra.mxu0 0
        %979 = vmatprep.subr.bf16.mxu0 0
        %980 = vmatpush1.bf16.xpose.msra.mxu0 0
        %981 = vmatprep.subr.bf16.mxu0 0
        %982 = vmatpush1.bf16.xpose.msra.mxu0 0
        %983 = vmatprep.subr.bf16.mxu0 0
        %984 = vmatpush1.bf16.xpose.msra.mxu0 0
        %985 = vmatprep.subr.bf16.mxu0 0
        %986 = vmatpush1.bf16.xpose.msra.mxu0 0
        %987 = vmatprep.subr.bf16.mxu0 0
        %988 = vmatpush1.bf16.xpose.msra.mxu0 0
        %989 = vmatprep.mubr.bf16.mxu0 0
        %990 = vmatmul.mubr.bf16.gmra.mrb[0].mxu0 %v952
        %v991 = vpop.f32.mrb[0].mxu0
        %v992 = vadd.f32 %v798, %v991
        %v993 = vpop.f32.mrb[0].mxu0
        %v994 = vpop.f32.mrb[0].mxu0
        %v995 = vpop.f32.mrb[0].mxu0
        %996 = vdwg.mxu0
        %v997 = vsel %vm803, %v845, -inf
        %998 = vmax.xlane.f32.xlu0 %v997
        %v999 = vpop.xlane.xlu0 %998
        %v1000 = vsel %vm803, %v894, -inf
        %1001 = vmax.xlane.f32.xlu0 %v1000
        %v1002 = vpop.xlane.xlu0 %1001
        %v1003 = vsel %vm803, %v943, -inf
        %1004 = vmax.xlane.f32.xlu0 %v1003
        %v1005 = vpop.xlane.xlu0 %1004
        %v1006 = vsel %vm803, %v992, -inf
        %1007 = vmax.xlane.f32.xlu0 %v1006
        %v1008 = vpop.xlane.xlu0 %1007
        %v1009 = vsub.f32 %v845, %v999
        %v1010 = vsub.f32 %v894, %v1002
        %v1011 = vsub.f32 %v943, %v1005
        %v1012 = vsub.f32 %v992, %v1008
        %v1013 = vmul.f32 %v1009, 1.442695
        %v1014 = vpow.pop %v1013
        %v1015 = vmul.f32 %v1010, 1.442695
        %v1016 = vpow.pop %v1015
        %v1017 = vmul.f32 %v1011, 1.442695
        %v1018 = vpow.pop %v1017
        %v1019 = vmul.f32 %v1012, 1.442695
        %v1020 = vpow.pop %v1019
        %v1021 = vsel %vm803, %v1014, 0.0
        %1022 = vadd.xlane.f32.xlu0 %v1021
        %v1023 = vpop.xlane.xlu0 %1022
        %v1024 = vsel %vm803, %v1016, 0.0
        %1025 = vadd.xlane.f32.xlu0 %v1024
        %v1026 = vpop.xlane.xlu0 %1025
        %v1027 = vsel %vm803, %v1018, 0.0
        %1028 = vadd.xlane.f32.xlu0 %v1027
        %v1029 = vpop.xlane.xlu0 %1028
        %v1030 = vsel %vm803, %v1020, 0.0
        %1031 = vadd.xlane.f32.xlu0 %v1030
        %v1032 = vpop.xlane.xlu0 %1031
        %v1033 = vrcp.pop %v1023
        %v1034 = vmul.f32 %v1014, %v1033
        %v1035 = vrcp.pop %v1026
        %v1036 = vmul.f32 %v1016, %v1035
        %v1037 = vrcp.pop %v1029
        %v1038 = vmul.f32 %v1018, %v1037
        %v1039 = vrcp.pop %v1032
        %v1040 = vmul.f32 %v1020, %v1039
        %1041 = vst.msk [vmem:[%s483] sm:$0xff] %vm803, %v1034
        %1042 = vst.msk [vmem:[%s483 + $0x8] sm:$0xff] %vm803, %v1036
        %1043 = vst.msk [vmem:[%s483 + $0x10] sm:$0xff] %vm803, %v1038
        %1044 = vst.msk [vmem:[%s483 + $0x18] sm:$0xff] %vm803, %v1040
        %v1045 = vpack.c.bf16 %v1034, %v1034
        %v1046 = vpack.c.bf16 %v1036, %v1036
        %v1047 = vpack.c.bf16 %v1038, %v1038
        %v1048 = vpack.c.bf16 %v1040, %v1040
        %1049 = vrot.lane.b32.xlu0 %v789, 112
        %v1050 = vpop.permute.xlu0 %1049
        %v1052 = vsel %vm803, %v1045, 0
        %vm1054 = vcmask 1043456
        %v1056 = vsel %vm1054, %v1050, 0
        %1058 = vmatprep.subr.bf16.mxu0 0
        %1059 = vmatpush1.bf16.msra.mxu0 %v1056
        %1060 = vmatprep.subr.bf16.mxu0 0
        %1061 = vmatpush1.bf16.msra.mxu0 0
        %1062 = vmatprep.subr.bf16.mxu0 0
        %1063 = vmatpush1.bf16.msra.mxu0 0
        %1064 = vmatprep.subr.bf16.mxu0 0
        %1065 = vmatpush1.bf16.msra.mxu0 0
        %1066 = vmatprep.subr.bf16.mxu0 0
        %1067 = vmatpush1.bf16.msra.mxu0 0
        %1068 = vmatprep.subr.bf16.mxu0 0
        %1069 = vmatpush1.bf16.msra.mxu0 0
        %1070 = vmatprep.subr.bf16.mxu0 0
        %1071 = vmatpush1.bf16.msra.mxu0 0
        %1072 = vmatprep.subr.bf16.mxu0 0
        %1073 = vmatpush1.bf16.msra.mxu0 0
        %1074 = vmatprep.subr.bf16.mxu0 0
        %1075 = vmatpush1.bf16.msra.mxu0 0
        %1076 = vmatprep.subr.bf16.mxu0 0
        %1077 = vmatpush1.bf16.msra.mxu0 0
        %1078 = vmatprep.subr.bf16.mxu0 0
        %1079 = vmatpush1.bf16.msra.mxu0 0
        %1080 = vmatprep.subr.bf16.mxu0 0
        %1081 = vmatpush1.bf16.msra.mxu0 0
        %1082 = vmatprep.subr.bf16.mxu0 0
        %1083 = vmatpush1.bf16.msra.mxu0 0
        %1084 = vmatprep.subr.bf16.mxu0 0
        %1085 = vmatpush1.bf16.msra.mxu0 0
        %1086 = vmatprep.subr.bf16.mxu0 0
        %1087 = vmatpush1.bf16.msra.mxu0 0
        %1088 = vmatprep.subr.bf16.mxu0 0
        %1089 = vmatpush1.bf16.msra.mxu0 0
        %1090 = vmatprep.mubr.bf16.mxu0 0
        %1091 = vmatmul.mubr.bf16.gmra.mrb[0].mxu0 %v1052
        %v1092 = vpop.f32.mrb[0].mxu0
        %v1093 = vadd.f32 0.0, %v1092
        %v1094 = vpop.f32.mrb[0].mxu0
        %v1095 = vpop.f32.mrb[0].mxu0
        %v1096 = vpop.f32.mrb[0].mxu0
        %1097 = vdwg.mxu0
        %1098 = vrot.lane.b32.xlu0 %v790, 112
        %v1099 = vpop.permute.xlu0 %1098
        %v1101 = vsel %vm803, %v1046, 0
        %v1104 = vsel %vm1054, %v1099, 0
        %1106 = vmatprep.subr.bf16.mxu0 0
        %1107 = vmatpush1.bf16.msra.mxu0 %v1104
        %1108 = vmatprep.subr.bf16.mxu0 0
        %1109 = vmatpush1.bf16.msra.mxu0 0
        %1110 = vmatprep.subr.bf16.mxu0 0
        %1111 = vmatpush1.bf16.msra.mxu0 0
        %1112 = vmatprep.subr.bf16.mxu0 0
        %1113 = vmatpush1.bf16.msra.mxu0 0
        %1114 = vmatprep.subr.bf16.mxu0 0
        %1115 = vmatpush1.bf16.msra.mxu0 0
        %1116 = vmatprep.subr.bf16.mxu0 0
        %1117 = vmatpush1.bf16.msra.mxu0 0
        %1118 = vmatprep.subr.bf16.mxu0 0
        %1119 = vmatpush1.bf16.msra.mxu0 0
        %1120 = vmatprep.subr.bf16.mxu0 0
        %1121 = vmatpush1.bf16.msra.mxu0 0
        %1122 = vmatprep.subr.bf16.mxu0 0
        %1123 = vmatpush1.bf16.msra.mxu0 0
        %1124 = vmatprep.subr.bf16.mxu0 0
        %1125 = vmatpush1.bf16.msra.mxu0 0
        %1126 = vmatprep.subr.bf16.mxu0 0
        %1127 = vmatpush1.bf16.msra.mxu0 0
        %1128 = vmatprep.subr.bf16.mxu0 0
        %1129 = vmatpush1.bf16.msra.mxu0 0
        %1130 = vmatprep.subr.bf16.mxu0 0
        %1131 = vmatpush1.bf16.msra.mxu0 0
        %1132 = vmatprep.subr.bf16.mxu0 0
        %1133 = vmatpush1.bf16.msra.mxu0 0
        %1134 = vmatprep.subr.bf16.mxu0 0
        %1135 = vmatpush1.bf16.msra.mxu0 0
        %1136 = vmatprep.subr.bf16.mxu0 0
        %1137 = vmatpush1.bf16.msra.mxu0 0
        %1138 = vmatprep.mubr.bf16.mxu0 0
        %1139 = vmatmul.mubr.bf16.gmra.mrb[0].mxu0 %v1101
        %v1140 = vpop.f32.mrb[0].mxu0
        %v1141 = vadd.f32 0.0, %v1140
        %v1142 = vpop.f32.mrb[0].mxu0
        %v1143 = vpop.f32.mrb[0].mxu0
        %v1144 = vpop.f32.mrb[0].mxu0
        %1145 = vdwg.mxu0
        %1146 = vrot.lane.b32.xlu0 %v791, 112
        %v1147 = vpop.permute.xlu0 %1146
        %v1149 = vsel %vm803, %v1047, 0
        %v1152 = vsel %vm1054, %v1147, 0
        %1154 = vmatprep.subr.bf16.mxu0 0
        %1155 = vmatpush1.bf16.msra.mxu0 %v1152
        %1156 = vmatprep.subr.bf16.mxu0 0
        %1157 = vmatpush1.bf16.msra.mxu0 0
        %1158 = vmatprep.subr.bf16.mxu0 0
        %1159 = vmatpush1.bf16.msra.mxu0 0
        %1160 = vmatprep.subr.bf16.mxu0 0
        %1161 = vmatpush1.bf16.msra.mxu0 0
        %1162 = vmatprep.subr.bf16.mxu0 0
        %1163 = vmatpush1.bf16.msra.mxu0 0
        %1164 = vmatprep.subr.bf16.mxu0 0
        %1165 = vmatpush1.bf16.msra.mxu0 0
        %1166 = vmatprep.subr.bf16.mxu0 0
        %1167 = vmatpush1.bf16.msra.mxu0 0
        %1168 = vmatprep.subr.bf16.mxu0 0
        %1169 = vmatpush1.bf16.msra.mxu0 0
        %1170 = vmatprep.subr.bf16.mxu0 0
        %1171 = vmatpush1.bf16.msra.mxu0 0
        %1172 = vmatprep.subr.bf16.mxu0 0
        %1173 = vmatpush1.bf16.msra.mxu0 0
        %1174 = vmatprep.subr.bf16.mxu0 0
        %1175 = vmatpush1.bf16.msra.mxu0 0
        %1176 = vmatprep.subr.bf16.mxu0 0
        %1177 = vmatpush1.bf16.msra.mxu0 0
        %1178 = vmatprep.subr.bf16.mxu0 0
        %1179 = vmatpush1.bf16.msra.mxu0 0
        %1180 = vmatprep.subr.bf16.mxu0 0
        %1181 = vmatpush1.bf16.msra.mxu0 0
        %1182 = vmatprep.subr.bf16.mxu0 0
        %1183 = vmatpush1.bf16.msra.mxu0 0
        %1184 = vmatprep.subr.bf16.mxu0 0
        %1185 = vmatpush1.bf16.msra.mxu0 0
        %1186 = vmatprep.mubr.bf16.mxu0 0
        %1187 = vmatmul.mubr.bf16.gmra.mrb[0].mxu0 %v1149
        %v1188 = vpop.f32.mrb[0].mxu0
        %v1189 = vadd.f32 0.0, %v1188
        %v1190 = vpop.f32.mrb[0].mxu0
        %v1191 = vpop.f32.mrb[0].mxu0
        %v1192 = vpop.f32.mrb[0].mxu0
        %1193 = vdwg.mxu0
        %1194 = vrot.lane.b32.xlu0 %v792, 112
        %v1195 = vpop.permute.xlu0 %1194
        %v1197 = vsel %vm803, %v1048, 0
        %v1200 = vsel %vm1054, %v1195, 0
        %1202 = vmatprep.subr.bf16.mxu0 0
        %1203 = vmatpush1.bf16.msra.mxu0 %v1200
        %1204 = vmatprep.subr.bf16.mxu0 0
        %1205 = vmatpush1.bf16.msra.mxu0 0
        %1206 = vmatprep.subr.bf16.mxu0 0
        %1207 = vmatpush1.bf16.msra.mxu0 0
        %1208 = vmatprep.subr.bf16.mxu0 0
        %1209 = vmatpush1.bf16.msra.mxu0 0
        %1210 = vmatprep.subr.bf16.mxu0 0
        %1211 = vmatpush1.bf16.msra.mxu0 0
        %1212 = vmatprep.subr.bf16.mxu0 0
        %1213 = vmatpush1.bf16.msra.mxu0 0
        %1214 = vmatprep.subr.bf16.mxu0 0
        %1215 = vmatpush1.bf16.msra.mxu0 0
        %1216 = vmatprep.subr.bf16.mxu0 0
        %1217 = vmatpush1.bf16.msra.mxu0 0
        %1218 = vmatprep.subr.bf16.mxu0 0
        %1219 = vmatpush1.bf16.msra.mxu0 0
        %1220 = vmatprep.subr.bf16.mxu0 0
        %1221 = vmatpush1.bf16.msra.mxu0 0
        %1222 = vmatprep.subr.bf16.mxu0 0
        %1223 = vmatpush1.bf16.msra.mxu0 0
        %1224 = vmatprep.subr.bf16.mxu0 0
        %1225 = vmatpush1.bf16.msra.mxu0 0
        %1226 = vmatprep.subr.bf16.mxu0 0
        %1227 = vmatpush1.bf16.msra.mxu0 0
        %1228 = vmatprep.subr.bf16.mxu0 0
        %1229 = vmatpush1.bf16.msra.mxu0 0
        %1230 = vmatprep.subr.bf16.mxu0 0
        %1231 = vmatpush1.bf16.msra.mxu0 0
        %1232 = vmatprep.subr.bf16.mxu0 0
        %1233 = vmatpush1.bf16.msra.mxu0 0
        %1234 = vmatprep.mubr.bf16.mxu0 0
        %1235 = vmatmul.mubr.bf16.gmra.mrb[0].mxu0 %v1197
        %v1236 = vpop.f32.mrb[0].mxu0
        %v1237 = vadd.f32 0.0, %v1236
        %v1238 = vpop.f32.mrb[0].mxu0
        %v1239 = vpop.f32.mrb[0].mxu0
        %v1240 = vpop.f32.mrb[0].mxu0
        %1241 = vdwg.mxu0
        %v1242 = vpack.c.bf16 %v1093, %v1093
        %v1243 = vld [vmem:[%s504] sm:$0xf]
        %v1244 = vpack.c.bf16 %v1141, %v1141
        %s1245 = scalar_lea.vmem %s504, 4
        %v1246 = vld [vmem:[%s1245] sm:$0xf]
        %v1248 = vsel %vm803, %v1244, 0
        %v1251 = vsel %vm1054, %v1246, 0
        %1253 = vmatprep.subr.bf16.mxu0 0
        %1254 = vmatpush1.bf16.msra.mxu0 %v1251
        %1255 = vmatprep.subr.bf16.mxu0 0
        %1256 = vmatpush1.bf16.msra.mxu0 0
        %1257 = vmatprep.subr.bf16.mxu0 0
        %1258 = vmatpush1.bf16.msra.mxu0 0
        %1259 = vmatprep.subr.bf16.mxu0 0
        %1260 = vmatpush1.bf16.msra.mxu0 0
        %1261 = vmatprep.subr.bf16.mxu0 0
        %1262 = vmatpush1.bf16.msra.mxu0 0
        %1263 = vmatprep.subr.bf16.mxu0 0
        %1264 = vmatpush1.bf16.msra.mxu0 0
        %1265 = vmatprep.subr.bf16.mxu0 0
        %1266 = vmatpush1.bf16.msra.mxu0 0
        %1267 = vmatprep.subr.bf16.mxu0 0
        %1268 = vmatpush1.bf16.msra.mxu0 0
        %1269 = vmatprep.subr.bf16.mxu0 0
        %1270 = vmatpush1.bf16.msra.mxu0 0
        %1271 = vmatprep.subr.bf16.mxu0 0
        %1272 = vmatpush1.bf16.msra.mxu0 0
        %1273 = vmatprep.subr.bf16.mxu0 0
        %1274 = vmatpush1.bf16.msra.mxu0 0
        %1275 = vmatprep.subr.bf16.mxu0 0
        %1276 = vmatpush1.bf16.msra.mxu0 0
        %1277 = vmatprep.subr.bf16.mxu0 0
        %1278 = vmatpush1.bf16.msra.mxu0 0
        %1279 = vmatprep.subr.bf16.mxu0 0
        %1280 = vmatpush1.bf16.msra.mxu0 0
        %1281 = vmatprep.subr.bf16.mxu0 0
        %1282 = vmatpush1.bf16.msra.mxu0 0
        %1283 = vmatprep.subr.bf16.mxu0 0
        %1284 = vmatpush1.bf16.msra.mxu0 0
        %1285 = vmatprep.mubr.bf16.mxu0 0
        %1286 = vmatmul.mubr.bf16.gmra.mrb[0].mxu0 %v1248
        %v1287 = vpop.f32.mrb[0].mxu0
        %v1288 = vadd.f32 0.0, %v1287
        %v1289 = vpop.f32.mrb[0].mxu0
        %v1290 = vpop.f32.mrb[0].mxu0
        %v1291 = vpop.f32.mrb[0].mxu0
        %1292 = vdwg.mxu0
        %v1294 = vsel %vm803, %v1242, 0
        %v1297 = vsel %vm1054, %v1243, 0
        %1299 = vmatprep.subr.bf16.mxu0 0
        %1300 = vmatpush1.bf16.msra.mxu0 %v1297
        %1301 = vmatprep.subr.bf16.mxu0 0
        %1302 = vmatpush1.bf16.msra.mxu0 0
        %1303 = vmatprep.subr.bf16.mxu0 0
        %1304 = vmatpush1.bf16.msra.mxu0 0
        %1305 = vmatprep.subr.bf16.mxu0 0
        %1306 = vmatpush1.bf16.msra.mxu0 0
        %1307 = vmatprep.subr.bf16.mxu0 0
        %1308 = vmatpush1.bf16.msra.mxu0 0
        %1309 = vmatprep.subr.bf16.mxu0 0
        %1310 = vmatpush1.bf16.msra.mxu0 0
        %1311 = vmatprep.subr.bf16.mxu0 0
        %1312 = vmatpush1.bf16.msra.mxu0 0
        %1313 = vmatprep.subr.bf16.mxu0 0
        %1314 = vmatpush1.bf16.msra.mxu0 0
        %1315 = vmatprep.subr.bf16.mxu0 0
        %1316 = vmatpush1.bf16.msra.mxu0 0
        %1317 = vmatprep.subr.bf16.mxu0 0
        %1318 = vmatpush1.bf16.msra.mxu0 0
        %1319 = vmatprep.subr.bf16.mxu0 0
        %1320 = vmatpush1.bf16.msra.mxu0 0
        %1321 = vmatprep.subr.bf16.mxu0 0
        %1322 = vmatpush1.bf16.msra.mxu0 0
        %1323 = vmatprep.subr.bf16.mxu0 0
        %1324 = vmatpush1.bf16.msra.mxu0 0
        %1325 = vmatprep.subr.bf16.mxu0 0
        %1326 = vmatpush1.bf16.msra.mxu0 0
        %1327 = vmatprep.subr.bf16.mxu0 0
        %1328 = vmatpush1.bf16.msra.mxu0 0
        %1329 = vmatprep.subr.bf16.mxu0 0
        %1330 = vmatpush1.bf16.msra.mxu0 0
        %1331 = vmatprep.mubr.bf16.mxu0 0
        %1332 = vmatmul.mubr.bf16.gmra.mrb[0].mxu0 %v1294
        %v1333 = vpop.f32.mrb[0].mxu0
        %v1334 = vadd.f32 %v1288, %v1333
        %v1335 = vpop.f32.mrb[0].mxu0
        %v1336 = vpop.f32.mrb[0].mxu0
        %v1337 = vpop.f32.mrb[0].mxu0
        %1338 = vdwg.mxu0
        %v1339 = vpack.c.bf16 %v1189, %v1189
        %s1340 = scalar_lea.vmem %s504, 8
        %v1341 = vld [vmem:[%s1340] sm:$0xf]
        %v1343 = vsel %vm803, %v1339, 0
        %v1346 = vsel %vm1054, %v1341, 0
        %1348 = vmatprep.subr.bf16.mxu0 0
        %1349 = vmatpush1.bf16.msra.mxu0 %v1346
        %1350 = vmatprep.subr.bf16.mxu0 0
        %1351 = vmatpush1.bf16.msra.mxu0 0
        %1352 = vmatprep.subr.bf16.mxu0 0
        %1353 = vmatpush1.bf16.msra.mxu0 0
        %1354 = vmatprep.subr.bf16.mxu0 0
        %1355 = vmatpush1.bf16.msra.mxu0 0
        %1356 = vmatprep.subr.bf16.mxu0 0
        %1357 = vmatpush1.bf16.msra.mxu0 0
        %1358 = vmatprep.subr.bf16.mxu0 0
        %1359 = vmatpush1.bf16.msra.mxu0 0
        %1360 = vmatprep.subr.bf16.mxu0 0
        %1361 = vmatpush1.bf16.msra.mxu0 0
        %1362 = vmatprep.subr.bf16.mxu0 0
        %1363 = vmatpush1.bf16.msra.mxu0 0
        %1364 = vmatprep.subr.bf16.mxu0 0
        %1365 = vmatpush1.bf16.msra.mxu0 0
        %1366 = vmatprep.subr.bf16.mxu0 0
        %1367 = vmatpush1.bf16.msra.mxu0 0
        %1368 = vmatprep.subr.bf16.mxu0 0
        %1369 = vmatpush1.bf16.msra.mxu0 0
        %1370 = vmatprep.subr.bf16.mxu0 0
        %1371 = vmatpush1.bf16.msra.mxu0 0
        %1372 = vmatprep.subr.bf16.mxu0 0
        %1373 = vmatpush1.bf16.msra.mxu0 0
        %1374 = vmatprep.subr.bf16.mxu0 0
        %1375 = vmatpush1.bf16.msra.mxu0 0
        %1376 = vmatprep.subr.bf16.mxu0 0
        %1377 = vmatpush1.bf16.msra.mxu0 0
        %1378 = vmatprep.subr.bf16.mxu0 0
        %1379 = vmatpush1.bf16.msra.mxu0 0
        %1380 = vmatprep.mubr.bf16.mxu0 0
        %1381 = vmatmul.mubr.bf16.gmra.mrb[0].mxu0 %v1343
        %v1382 = vpop.f32.mrb[0].mxu0
        %v1383 = vadd.f32 0.0, %v1382
        %v1384 = vpop.f32.mrb[0].mxu0
        %v1385 = vpop.f32.mrb[0].mxu0
        %v1386 = vpop.f32.mrb[0].mxu0
        %1387 = vdwg.mxu0
        %v1388 = vadd.f32 %v1334, %v1383
        %v1389 = vpack.c.bf16 %v1237, %v1237
        %s1390 = scalar_lea.vmem %s504, 12
        %v1391 = vld [vmem:[%s1390] sm:$0xf]
        %v1393 = vsel %vm803, %v1389, 0
        %v1396 = vsel %vm1054, %v1391, 0
        %1398 = vmatprep.subr.bf16.mxu0 0
        %1399 = vmatpush1.bf16.msra.mxu0 %v1396
        %1400 = vmatprep.subr.bf16.mxu0 0
        %1401 = vmatpush1.bf16.msra.mxu0 0
        %1402 = vmatprep.subr.bf16.mxu0 0
        %1403 = vmatpush1.bf16.msra.mxu0 0
        %1404 = vmatprep.subr.bf16.mxu0 0
        %1405 = vmatpush1.bf16.msra.mxu0 0
        %1406 = vmatprep.subr.bf16.mxu0 0
        %1407 = vmatpush1.bf16.msra.mxu0 0
        %1408 = vmatprep.subr.bf16.mxu0 0
        %1409 = vmatpush1.bf16.msra.mxu0 0
        %1410 = vmatprep.subr.bf16.mxu0 0
        %1411 = vmatpush1.bf16.msra.mxu0 0
        %1412 = vmatprep.subr.bf16.mxu0 0
        %1413 = vmatpush1.bf16.msra.mxu0 0
        %1414 = vmatprep.subr.bf16.mxu0 0
        %1415 = vmatpush1.bf16.msra.mxu0 0
        %1416 = vmatprep.subr.bf16.mxu0 0
        %1417 = vmatpush1.bf16.msra.mxu0 0
        %1418 = vmatprep.subr.bf16.mxu0 0
        %1419 = vmatpush1.bf16.msra.mxu0 0
        %1420 = vmatprep.subr.bf16.mxu0 0
        %1421 = vmatpush1.bf16.msra.mxu0 0
        %1422 = vmatprep.subr.bf16.mxu0 0
        %1423 = vmatpush1.bf16.msra.mxu0 0
        %1424 = vmatprep.subr.bf16.mxu0 0
        %1425 = vmatpush1.bf16.msra.mxu0 0
        %1426 = vmatprep.subr.bf16.mxu0 0
        %1427 = vmatpush1.bf16.msra.mxu0 0
        %1428 = vmatprep.subr.bf16.mxu0 0
        %1429 = vmatpush1.bf16.msra.mxu0 0
        %1430 = vmatprep.mubr.bf16.mxu0 0
        %1431 = vmatmul.mubr.bf16.gmra.mrb[0].mxu0 %v1393
        %v1432 = vpop.f32.mrb[0].mxu0
        %v1433 = vadd.f32 0.0, %v1432
        %v1434 = vpop.f32.mrb[0].mxu0
        %v1435 = vpop.f32.mrb[0].mxu0
        %v1436 = vpop.f32.mrb[0].mxu0
        %1437 = vdwg.mxu0
        %v1438 = vadd.f32 %v1388, %v1433
        %v1439 = vlaneseq
        %v1440 = vshrl.u32 %v1439, 7
        %v1441 = vsub.s32 0, %v1440
        %v1442 = vrot.slane %v532, %v1441
        %v1443 = vadd.f32 %v1438, %v1442
        %v1444 = vadd.f32 %v1443, %v530
        %v1445 = vsel %vm589, %v1444, 0.0
        %1446 = vadd.xlane.f32.xlu0 %v1445
        %v1447 = vpop.xlane.xlu0 %1446
        %v1448 = vrcp.pop 32.0
        %v1449 = vmul.f32 %v1447, %v1448
        %v1450 = vsub.f32 %v1444, %v1449
        %v1451 = vmul.f32 %v1450, %v1450
        %v1452 = vsel %vm589, %v1451, 0.0
        %1453 = vadd.xlane.f32.xlu0 %v1452
        %v1454 = vpop.xlane.xlu0 %1453
        %v1455 = vmul.f32 %v1454, %v1448
        %v1456 = vadd.f32 %v1455, 1e-06
        %v1457 = vrsqrt.pop %v1456
        %v1458 = vmul.f32 %v1450, %v1457
        %v1459 = vlaneseq
        %v1460 = vshrl.u32 %v1459, 7
        %v1461 = vsub.s32 2, %v1460
        %v1462 = vrot.slane %v532, %v1461
        %v1463 = vmul.f32 %v1458, %v1462
        %v1464 = vlaneseq
        %v1465 = vshrl.u32 %v1464, 7
        %v1466 = vsub.s32 3, %v1465
        %v1467 = vrot.slane %v532, %v1466
        %v1468 = vadd.f32 %v1463, %v1467
        %v1469 = vpack.c.bf16 %v1468, %v1468
        %v1470 = vld [vmem:[%s513] sm:$0xf]
        %v1471 = vld [vmem:[%s513 + $0x4] sm:$0xf]
        %v1472 = vld [vmem:[%s513 + $0x8] sm:$0xf]
        %v1473 = vld [vmem:[%s513 + $0xc] sm:$0xf]
        %v1474 = vld [vmem:[%s516] sm:$0x1]
        %v1476 = vlaneseq
        %v1477 = vshrl.u32 %v1476, 7
        %v1478 = vsub.s32 0, %v1477
        %v1479 = vrot.slane %v1474, %v1478
        %v1485 = vunpack.c.l.b16 %v1470
        %v1486 = vunpack.c.l.b16 %v1471
        %v1487 = vunpack.c.l.b16 %v1472
        %v1488 = vunpack.c.l.b16 %v1473
        %v1489 = vpack.c.b16 %v1486, %v1485
        %v1490 = vpack.c.b16 %v1488, %v1487
        %v1494 = vsel %vm589, %v1469, 0
        %1496 = vmatprep.subr.bf16.mxu0 0
        %1497 = vmatpush1.bf16.msra.mxu0 %v1489
        %1498 = vmatprep.subr.bf16.mxu0 0
        %1499 = vmatpush1.bf16.msra.mxu0 %v1490
        %1500 = vmatprep.subr.bf16.mxu0 0
        %1501 = vmatpush1.bf16.msra.mxu0 0
        %1502 = vmatprep.subr.bf16.mxu0 0
        %1503 = vmatpush1.bf16.msra.mxu0 0
        %1504 = vmatprep.subr.bf16.mxu0 0
        %1505 = vmatpush1.bf16.msra.mxu0 0
        %1506 = vmatprep.subr.bf16.mxu0 0
        %1507 = vmatpush1.bf16.msra.mxu0 0
        %1508 = vmatprep.subr.bf16.mxu0 0
        %1509 = vmatpush1.bf16.msra.mxu0 0
        %1510 = vmatprep.subr.bf16.mxu0 0
        %1511 = vmatpush1.bf16.msra.mxu0 0
        %1512 = vmatprep.subr.bf16.mxu0 0
        %1513 = vmatpush1.bf16.msra.mxu0 0
        %1514 = vmatprep.subr.bf16.mxu0 0
        %1515 = vmatpush1.bf16.msra.mxu0 0
        %1516 = vmatprep.subr.bf16.mxu0 0
        %1517 = vmatpush1.bf16.msra.mxu0 0
        %1518 = vmatprep.subr.bf16.mxu0 0
        %1519 = vmatpush1.bf16.msra.mxu0 0
        %1520 = vmatprep.subr.bf16.mxu0 0
        %1521 = vmatpush1.bf16.msra.mxu0 0
        %1522 = vmatprep.subr.bf16.mxu0 0
        %1523 = vmatpush1.bf16.msra.mxu0 0
        %1524 = vmatprep.subr.bf16.mxu0 0
        %1525 = vmatpush1.bf16.msra.mxu0 0
        %1526 = vmatprep.subr.bf16.mxu0 0
        %1527 = vmatpush1.bf16.msra.mxu0 0
        %1528 = vmatprep.mubr.bf16.mxu0 0
        %1529 = vmatmul.mubr.bf16.gmra.mrb[0].mxu0 %v1494
        %v1530 = vpop.f32.mrb[0].mxu0
        %v1531 = vadd.f32 %v1479, %v1530
        %v1532 = vpop.f32.mrb[0].mxu0
        %v1533 = vpop.f32.mrb[0].mxu0
        %v1534 = vpop.f32.mrb[0].mxu0
        %1535 = vdwg.mxu0
        %v1536 = vmax.f32 %v1531, 0.0
        %v1537 = vpack.c.bf16 %v1536, %v1536
        %v1538 = vld [vmem:[%s521] sm:$0xf]
        %v1539 = vld [vmem:[%s521 + $0x4] sm:$0xf]
        %v1540 = vld [vmem:[%s521 + $0x8] sm:$0xf]
        %v1541 = vld [vmem:[%s521 + $0xc] sm:$0xf]
        %v1542 = vld [vmem:[%s521 + $0x10] sm:$0xf]
        %v1543 = vld [vmem:[%s521 + $0x14] sm:$0xf]
        %v1544 = vld [vmem:[%s521 + $0x18] sm:$0xf]
        %v1545 = vld [vmem:[%s521 + $0x1c] sm:$0xf]
        %v1546 = vlaneseq
        %v1547 = vshrl.u32 %v1546, 7
        %v1548 = vsub.s32 1, %v1547
        %v1549 = vrot.slane %v532, %v1548
        %v1558 = vunpack.c.l.b16 %v1538
        %v1559 = vunpack.c.l.b16 %v1539
        %v1560 = vunpack.c.l.b16 %v1540
        %v1561 = vunpack.c.l.b16 %v1541
        %v1562 = vunpack.c.l.b16 %v1542
        %v1563 = vunpack.c.l.b16 %v1543
        %v1564 = vunpack.c.l.b16 %v1544
        %v1565 = vunpack.c.l.b16 %v1545
        %v1566 = vpack.c.b16 %v1559, %v1558
        %v1567 = vpack.c.b16 %v1561, %v1560
        %v1568 = vpack.c.b16 %v1563, %v1562
        %v1569 = vpack.c.b16 %v1565, %v1564
        %vm1574 = vcmask 523264
        %v1576 = vsel %vm1574, %v1537, 0
        %1578 = vmatprep.subr.bf16.mxu0 0
        %1579 = vmatpush1.bf16.msra.mxu0 %v1566
        %1580 = vmatprep.subr.bf16.mxu0 0
        %1581 = vmatpush1.bf16.msra.mxu0 %v1567
        %1582 = vmatprep.subr.bf16.mxu0 0
        %1583 = vmatpush1.bf16.msra.mxu0 %v1568
        %1584 = vmatprep.subr.bf16.mxu0 0
        %1585 = vmatpush1.bf16.msra.mxu0 %v1569
        %1586 = vmatprep.subr.bf16.mxu0 0
        %1587 = vmatpush1.bf16.msra.mxu0 0
        %1588 = vmatprep.subr.bf16.mxu0 0
        %1589 = vmatpush1.bf16.msra.mxu0 0
        %1590 = vmatprep.subr.bf16.mxu0 0
        %1591 = vmatpush1.bf16.msra.mxu0 0
        %1592 = vmatprep.subr.bf16.mxu0 0
        %1593 = vmatpush1.bf16.msra.mxu0 0
        %1594 = vmatprep.subr.bf16.mxu0 0
        %1595 = vmatpush1.bf16.msra.mxu0 0
        %1596 = vmatprep.subr.bf16.mxu0 0
        %1597 = vmatpush1.bf16.msra.mxu0 0
        %1598 = vmatprep.subr.bf16.mxu0 0
        %1599 = vmatpush1.bf16.msra.mxu0 0
        %1600 = vmatprep.subr.bf16.mxu0 0
        %1601 = vmatpush1.bf16.msra.mxu0 0
        %1602 = vmatprep.subr.bf16.mxu0 0
        %1603 = vmatpush1.bf16.msra.mxu0 0
        %1604 = vmatprep.subr.bf16.mxu0 0
        %1605 = vmatpush1.bf16.msra.mxu0 0
        %1606 = vmatprep.subr.bf16.mxu0 0
        %1607 = vmatpush1.bf16.msra.mxu0 0
        %1608 = vmatprep.subr.bf16.mxu0 0
        %1609 = vmatpush1.bf16.msra.mxu0 0
        %1610 = vmatprep.mubr.bf16.mxu0 0
        %1611 = vmatmul.mubr.bf16.gmra.mrb[0].mxu0 %v1576
        %v1612 = vpop.f32.mrb[0].mxu0
        %v1613 = vadd.f32 %v1549, %v1612
        %v1614 = vpop.f32.mrb[0].mxu0
        %v1615 = vpop.f32.mrb[0].mxu0
        %v1616 = vpop.f32.mrb[0].mxu0
        %1617 = vdwg.mxu0
        %v1618 = vadd.f32 %v1613, %v1468
        %v1619 = vsel %vm589, %v1618, 0.0
        %1620 = vadd.xlane.f32.xlu0 %v1619
        %v1621 = vpop.xlane.xlu0 %1620
        %v1622 = vmul.f32 %v1621, %v1448
        %v1623 = vsub.f32 %v1618, %v1622
        %v1624 = vmul.f32 %v1623, %v1623
        %v1625 = vsel %vm589, %v1624, 0.0
        %1626 = vadd.xlane.f32.xlu0 %v1625
        %v1627 = vpop.xlane.xlu0 %1626
        %v1628 = vmul.f32 %v1627, %v1448
        %v1629 = vadd.f32 %v1628, 1e-06
        %v1630 = vrsqrt.pop %v1629
        %v1631 = vmul.f32 %v1623, %v1630
        %v1632 = vlaneseq
        %v1633 = vshrl.u32 %v1632, 7
        %v1634 = vsub.s32 4, %v1633
        %v1635 = vrot.slane %v532, %v1634
        %v1636 = vmul.f32 %v1631, %v1635
        %v1637 = vlaneseq
        %v1638 = vshrl.u32 %v1637, 7
        %v1639 = vsub.s32 5, %v1638
        %v1640 = vrot.slane %v532, %v1639
        %v1641 = vadd.f32 %v1636, %v1640
        %1642 = vst.msk [vmem:[%s476] sm:$0xff] %vm589, %v1641
        %s1643 = sand.u32 %s282, 1
        %s1644 = scalar_lea.sflag [#allocation3], %s1643
        %s1645 = sand.u32 %s282, 1
        %s1646 = smul.addr %s1645, 8
        %s1647 = scalar_lea.vmem [#allocation2], %s1646
        %s1648 = sand.u32 %s310, 1
        %s1649 = scalar_lea.sflag [#allocation5], %s1648
        %s1650 = sand.u32 %s310, 1
        %s1651 = smul.addr %s1650, 32
        %s1652 = scalar_lea.vmem [#allocation4], %s1651
        // Predicated region
        $region61: #{tpu_custom_call.1} parent=55 // pred_check
          %p1653 = pneg %p292
        $region62: #{tpu_custom_call.1} parent=55 // pred_check_branch
          %1655 = sbr.rel (%p1653) target = $region64
        $region63: #{tpu_custom_call.1} parent=55 // pred_region
          %s1657 = ssub.s32 128, 128
          %1658 = vsyncadd %s1644, %s1657
          %s1659 = smul.addr %s32, 128
          %s1660 = scalar_lea.hbm %s9, %s1659
          %s1662 = sshll.u32 %s1647, 4
          %s1663 = int_to_ptr.vmem [resolvable:$true] %s1662
          %1665 = dma.vmem_to_hbm [thread:$0]  %s1663, 128, %s1660, %s1644
        $region64: #{tpu_custom_call.1} parent=55 // pred_fallthru
          _
        // Predicated region
        $region65: #{tpu_custom_call.1} parent=55 // pred_check
          %p1666 = pneg %p320
        $region66: #{tpu_custom_call.1} parent=55 // pred_check_branch
          %1668 = sbr.rel (%p1666) target = $region68
        $region67: #{tpu_custom_call.1} parent=55 // pred_region
          %s1670 = ssub.s32 512, 512
          %1671 = vsyncadd %s1649, %s1670
          %s1672 = smul.addr %s32, 4
          %s1673 = smul.addr %s33, 8
          %s1674 = sadd.s32 %s1672, %s1673
          %s1675 = smul.addr %s1674, 128
          %s1676 = scalar_lea.hbm %s10, %s1675
          %s1677 = sshll.u32 %s1652, 4
          %s1678 = int_to_ptr.vmem [resolvable:$true] %s1677
          %1683 = dma.vmem_to_hbm [thread:$0]  %s1678, 512, %s1676, %s1649, 128, 128, 8
        $region68: #{tpu_custom_call.1} parent=55 // pred_fallthru
          _
      $region56: #{tpu_custom_call.1} parent=5 // pred_fallthru
        _
      %p1684 = scmp.le.s32.totalorder 2, %s23
      // Predicated region
      $region69: #{tpu_custom_call.1} parent=5 // pred_check
        %p1685 = pneg %p1684
      $region70: #{tpu_custom_call.1} parent=5 // pred_check_branch
        %1687 = sbr.rel (%p1685) target = $region72
      $region71: #{tpu_custom_call.1} parent=5 // pred_region
        %s1688 = ssub.s32 %s23, 2
        // Predicated region
        $region73: #{tpu_custom_call.1} parent=71 // pred_check
          %p1689 = pneg %p298
        $region74: #{tpu_custom_call.1} parent=71 // pred_check_branch
          %1691 = sbr.rel (%p1689) target = $region76
        $region75: #{tpu_custom_call.1} parent=71 // pred_region
          %s1692 = sand.u32 %s283, 1
          %s1693 = scalar_lea.sflag [#allocation3], %s1692
          %s1694 = sand.u32 %s283, 1
          %s1695 = smul.addr %s1694, 8
          %s1696 = scalar_lea.vmem [#allocation2], %s1695
          %1697 = dma.done %s1693, 128
        $region76: #{tpu_custom_call.1} parent=71 // pred_fallthru
          _
        // Predicated region
        $region77: #{tpu_custom_call.1} parent=71 // pred_check
          %p1698 = pneg %p326
        $region78: #{tpu_custom_call.1} parent=71 // pred_check_branch
          %1700 = sbr.rel (%p1698) target = $region80
        $region79: #{tpu_custom_call.1} parent=71 // pred_region
          %s1701 = sand.u32 %s311, 1
          %s1702 = scalar_lea.sflag [#allocation5], %s1701
          %s1703 = sand.u32 %s311, 1
          %s1704 = smul.addr %s1703, 32
          %s1705 = scalar_lea.vmem [#allocation4], %s1704
          %1706 = dma.done %s1702, 512
        $region80: #{tpu_custom_call.1} parent=71 // pred_fallthru
          _
      $region72: #{tpu_custom_call.1} parent=5 // pred_fallthru
        _
    $region6: #{tpu_custom_call.1} parent=1 // loop_footer
      %s27 = sadd.s32 1, %s23
    $region7: #{tpu_custom_call.1} parent=1 // loop_footer_branch
      %22 = sbr.rel target = $region3
    $region8: #{tpu_custom_call.1} parent=1 // loop_exit
      _
    %1707 = vsyncpa [#allocation3], 1
    %s1708 = scalar_lea.sflag [#allocation3], 1
    %1709 = vsyncpa %s1708, 1
    %1710 = vsyncpa [#allocation5], 1
    %s1711 = scalar_lea.sflag [#allocation5], 1
    %1712 = vsyncpa %s1711, 1

</llo_original>
